<compile_context>
chip_gen: v6e
topology: v6e:2x2x1
jax: 0.10.0
libtpu: 0.0.40
codegen_flags: <defaults>
</compile_context>

<pallas_src>
import functools

import jax
import jax.numpy as jnp
from jax.experimental import pallas as pl
from jax.experimental.pallas import tpu as pltpu


# ---- model config (matches BinaryAutoencoder.__init__) ----
OBS_SPACE = 16
AE_HIDDEN_SIZE_1 = 64
AE_HIDDEN_SIZE_2 = 48
AE_HIDDEN_SIZE_3 = 32
Z_SIZE = 16

ENC_DIMS = [(OBS_SPACE, AE_HIDDEN_SIZE_1),
            (AE_HIDDEN_SIZE_1, AE_HIDDEN_SIZE_2),
            (AE_HIDDEN_SIZE_2, AE_HIDDEN_SIZE_3),
            (AE_HIDDEN_SIZE_3, Z_SIZE)]
DEC_DIMS = [(Z_SIZE, AE_HIDDEN_SIZE_3),
            (AE_HIDDEN_SIZE_3, AE_HIDDEN_SIZE_2),
            (AE_HIDDEN_SIZE_2, AE_HIDDEN_SIZE_1),
            (AE_HIDDEN_SIZE_1, OBS_SPACE)]
ALL_DIMS = ENC_DIMS + DEC_DIMS
N_LAYERS = len(ALL_DIMS)            # 8

PAD = 128                           # every *hidden* feature dim padded to one vreg lane width
MAX_TILE_B = 2048                   # upper bound on the batch tile

BATCH = 512                         # demo batch in __main__ (2 grid steps)


def binary_ae_kernel(w_ref, b_ref, x_ref, z_ref, out_ref):
    """One batch tile of the fused autoencoder forward.

    w_ref  : (N_LAYERS, PAD, PAD) bf16  zero-padded [in, out] weights (VMEM-resident)
    b_ref  : (N_LAYERS, PAD)      f32   zero-padded biases (one vreg tile)
    x_ref  : (tile_b, OBS_SPACE)  f32   un-padded input features
    z_ref  : (tile_b, Z_SIZE)     f32   latent output (real width)
    out_ref: (tile_b, OBS_SPACE)  f32   reconstruction output (real width)
    """
    b_all = b_ref[...]                                   # (N_LAYERS, PAD), loaded once

    def layer(h, l):
        # bf16 MXU matmul with f32 accumulation; bias/activations stay f32.
        # Zero-padded rows/cols contribute exactly 0, so padding is value-neutral.
        return (jnp.dot(h.astype(jnp.bfloat16), w_ref[l],
                        preferred_element_type=jnp.float32)
                + b_all[l:l + 1, :])

    # ---- encoder: layer 0 with K = OBS_SPACE directly (input is not lane-padded) ----
    h = (jnp.dot(x_ref[...].astype(jnp.bfloat16), w_ref[0, :OBS_SPACE, :],
                 preferred_element_type=jnp.float32)
         + b_all[0:1, :])
    h = jnp.maximum(h, 0.0)
    for l in (1, 2):
        h = jnp.maximum(layer(h, l), 0.0)

    latent = jax.nn.sigmoid(layer(h, 3))                 # padded lanes -> sigmoid(0)=0.5
    z_ref[...] = latent[:, :Z_SIZE].astype(z_ref.dtype)

    # ---- straight-through binarization (forward value only) ----
    # padded lanes hold 0.5, strict > 0.5 is False -> 0 -> decoder unaffected.
    d = (latent > 0.5).astype(jnp.float32)

    # ---- decoder: 3x (Linear + ReLU), then Linear ----
    for l in (4, 5, 6):
        d = jnp.maximum(layer(d, l), 0.0)
    out = layer(d, 7)
    out_ref[...] = out[:, :OBS_SPACE].astype(out_ref.dtype)


def pack_params(params):
    """Pack 8 (W[in,out], b[out]) pairs into a bf16 weight slab + f32 bias slab."""
    w_slab = jnp.zeros((N_LAYERS, PAD, PAD), jnp.bfloat16)
    b_slab = jnp.zeros((N_LAYERS, PAD), jnp.float32)
    for l, (w, b) in enumerate(params):
        din, dout = w.shape
        w_slab = w_slab.at[l, :din, :dout].set(w.astype(jnp.bfloat16))
        b_slab = b_slab.at[l, :dout].set(b.reshape(-1).astype(jnp.float32))
    return w_slab, b_slab


def _choose_tile_b(batch, max_tile=MAX_TILE_B):
    """Few large tiles; even tile count so v7x's two TensorCores both get work."""
    num_tiles = max(2, -(-batch // max_tile))
    if num_tiles % 2:
        num_tiles += 1
    tile = -(-batch // num_tiles)
    return max(8, ((tile + 7) // 8) * 8)      # sublane multiple


@functools.partial(jax.jit, static_argnames=("tile_b",))
def _forward_impl(x, w_slab, b_slab, *, tile_b):
    B, feat = x.shape
    assert feat == OBS_SPACE
    x = x.astype(jnp.float32)

    num_tiles = pl.cdiv(B, tile_b)
    b_pad = num_tiles * tile_b
    if b_pad != B:
        x = jnp.pad(x, ((0, b_pad - B), (0, 0)))

    cost = pl.CostEstimate(
        flops=2 * b_pad * PAD * PAD * N_LAYERS,
        transcendentals=b_pad * PAD,
        bytes_accessed=(b_pad * OBS_SPACE * 4            # x in
                        + b_pad * (Z_SIZE + OBS_SPACE) * 4  # z + out
                        + N_LAYERS * PAD * PAD * 2        # bf16 weight slab
                        + N_LAYERS * PAD * 4))            # f32 bias slab

    z, out = pl.pallas_call(
        binary_ae_kernel,
        out_shape=(
            jax.ShapeDtypeStruct((b_pad, Z_SIZE), jnp.float32),
            jax.ShapeDtypeStruct((b_pad, OBS_SPACE), jnp.float32),
        ),
        grid_spec=pltpu.PrefetchScalarGridSpec(
            num_scalar_prefetch=0,
            grid=(num_tiles,),
            in_specs=[
                # weights / biases: constant block index -> VMEM-resident across tiles
                pl.BlockSpec((N_LAYERS, PAD, PAD), lambda i: (0, 0, 0)),
                pl.BlockSpec((N_LAYERS, PAD), lambda i: (0, 0)),
                # activations: one batch tile per grid step, real (16-lane) width
                pl.BlockSpec((tile_b, OBS_SPACE), lambda i: (i, 0)),
            ],
            out_specs=[
                pl.BlockSpec((tile_b, Z_SIZE), lambda i: (i, 0)),
                pl.BlockSpec((tile_b, OBS_SPACE), lambda i: (i, 0)),
            ],
        ),
        compiler_params=pltpu.CompilerParams(
            # batch tiles are independent -> shard across TCs on v7x megacore
            dimension_semantics=("parallel",),
        ),
        cost_estimate=cost,
    )(w_slab, b_slab, x)

    if b_pad != B:
        z, out = z[:B], out[:B]
    return z, out


def binary_autoencoder_forward(x, w_slab, b_slab, max_tile_b=MAX_TILE_B):
    """x: [B, OBS_SPACE] f32. Returns (latent_z [B, Z_SIZE], output [B, OBS_SPACE])."""
    tile_b = _choose_tile_b(int(x.shape[0]), max_tile_b)
    return _forward_impl(x, w_slab, b_slab, tile_b=tile_b)


def init_params(key):
    """Deterministic synthetic parameters (shapes match the module's __init__)."""
    params = []
    for (din, dout) in ALL_DIMS:
        key, kw, kb = jax.random.split(key, 3)
        scale = 1.0 / jnp.sqrt(jnp.float32(din))
        w = jax.random.uniform(kw, (din, dout), jnp.float32, -scale, scale)
        b = jax.random.uniform(kb, (dout,), jnp.float32, -scale, scale)
        params.append((w, b))
    return params


def reference_forward(x, params, matmul_dtype=jnp.float32):
    """Pure-JAX reference of the PyTorch forward (use_binarization=True).

    matmul_dtype=float32  -> PyTorch-faithful f32 math.
    matmul_dtype=bfloat16 -> same matmul precision policy as the kernel.
    """
    def mm(a, w):
        return jnp.dot(a.astype(matmul_dtype), w.astype(matmul_dtype),
                       preferred_element_type=jnp.float32)

    h = x.astype(jnp.float32)
    for i, (w, b) in enumerate(params[:4]):
        h = mm(h, w) + b.reshape(1, -1)
        h = jax.nn.sigmoid(h) if i == 3 else jnp.maximum(h, 0.0)
    latent_z = h
    d = (latent_z > 0.5).astype(jnp.float32)
    for i, (w, b) in enumerate(params[4:]):
        d = mm(d, w) + b.reshape(1, -1)
        if i < 3:
            d = jnp.maximum(d, 0.0)
    return latent_z, d


if __name__ == "__main__":
    key = jax.random.PRNGKey(0)
    key, kx = jax.random.split(key)
    x = jax.random.normal(kx, (BATCH, OBS_SPACE), jnp.float32)
    params = init_params(key)
    w_slab, b_slab = pack_params(params)

    latent_z, output = binary_autoencoder_forward(x, w_slab, b_slab)
    jax.block_until_ready((latent_z, output))

    assert latent_z.shape == (BATCH, Z_SIZE)
    assert output.shape == (BATCH, OBS_SPACE)

    # (a) f32 (module-faithful) reference: the encoder is smooth, so bf16 matmul
    #     error is small and threshold-free.
    z32, out32 = reference_forward(x, params, jnp.float32)
    assert jnp.allclose(latent_z, z32, atol=1e-2), "latent_z mismatch vs f32 reference"

    # (b) bf16-matmul reference (same precision policy as the kernel): near-exact.
    #     Rows whose binary code sits at the 0.5 threshold may legitimately flip
    #     under tiny accumulation-order differences; exclude them (expect ~none).
    z16, out16 = reference_forward(x, params, jnp.bfloat16)
    assert jnp.allclose(latent_z, z16, atol=1e-3), "latent_z mismatch vs bf16 reference"
    same16 = jnp.all((latent_z > 0.5) == (z16 > 0.5), axis=1)
    assert float(jnp.mean(same16.astype(jnp.float32))) > 0.99
    err16 = jnp.max(jnp.abs(output - out16), axis=1)
    assert float(jnp.max(jnp.where(same16, err16, 0.0))) < 2e-3, "output mismatch vs bf16 reference"

    # (c) decoder vs the f32 reference on rows whose binary code agrees with it
    #     (the only difference there is bf16 matmul rounding).
    same32 = jnp.all((latent_z > 0.5) == (z32 > 0.5), axis=1)
    err32 = jnp.max(jnp.abs(output - out32), axis=1)
    assert float(jnp.max(jnp.where(same32, err32, 0.0))) < 5e-2, "output mismatch vs f32 reference"

    print("KERNEL_OK")
</pallas_src>

<mosaic_0001>
module attributes {stable_mosaic.version = 11 : i64} {
  func.func @binary_ae_kernel(%arg0: i32, %arg1: memref<8x128x128xbf16, #tpu.memory_space<vmem>>, %arg2: memref<8x128xf32, #tpu.memory_space<vmem>>, %arg3: memref<256x16xf32, #tpu.memory_space<vmem>>, %arg4: memref<256x16xf32, #tpu.memory_space<vmem>>, %arg5: memref<256x16xf32, #tpu.memory_space<vmem>>) attributes {dimension_semantics = [#tpu.dimension_semantics<parallel>], iteration_bounds = array<i64: 2>, scalar_prefetch = 0 : i64, scratch_operands = 0 : i64, tpu.core_type = #tpu.core_type<tc>, window_params = [{pipeline_mode = #tpu.pipeline_mode<synchronous>, transform_indices = @transform_0, window_bounds = array<i64: 8, 128, 128>}, {pipeline_mode = #tpu.pipeline_mode<synchronous>, transform_indices = @transform_1, window_bounds = array<i64: 8, 128>}, {transform_indices = @transform_2, window_bounds = array<i64: 256, 16>}, {transform_indices = @transform_3, window_bounds = array<i64: 256, 16>}, {transform_indices = @transform_4, window_bounds = array<i64: 256, 16>}]} {
    %c0 = arith.constant 0 : index
    %c0_0 = arith.constant 0 : index
    %0 = vector.load %arg2[%c0, %c0_0] : memref<8x128xf32, #tpu.memory_space<vmem>>, vector<8x128xf32>
    %c0_1 = arith.constant 0 : index
    %c0_2 = arith.constant 0 : index
    %1 = vector.load %arg3[%c0_1, %c0_2] : memref<256x16xf32, #tpu.memory_space<vmem>>, vector<256x16xf32>
    %2 = arith.truncf %1 : vector<256x16xf32> to vector<256x16xbf16>
    %c0_3 = arith.constant 0 : index
    %c0_4 = arith.constant 0 : index
    %c0_5 = arith.constant 0 : index
    %3 = vector.load %arg1[%c0_3, %c0_4, %c0_5] : memref<8x128x128xbf16, #tpu.memory_space<vmem>>, vector<1x16x128xbf16>
    %4 = vector.shape_cast %3 : vector<1x16x128xbf16> to vector<16x128xbf16>
    %cst = arith.constant dense<0.000000e+00> : vector<256x128xf32>
    %5 = tpu.matmul %2, %4, %cst {dimension_numbers = #tpu.dot_dimension_numbers<[1], [0], [0], [1], [0, 0, 1, 1], [], []>} : vector<256x16xbf16>, vector<16x128xbf16>, vector<256x128xf32> -> vector<256x128xf32>
    %6 = vector.extract_strided_slice %0 {offsets = [0, 0], sizes = [1, 128], strides = [1, 1]} : vector<8x128xf32> to vector<1x128xf32>
    %7 = vector.broadcast %6 : vector<1x128xf32> to vector<256x128xf32>
    %8 = arith.addf %5, %7 : vector<256x128xf32>
    %cst_6 = arith.constant 0.000000e+00 : f32
    %9 = vector.broadcast %cst_6 : f32 to vector<256x128xf32>
    %10 = arith.maximumf %8, %9 : vector<256x128xf32>
    %11 = arith.truncf %10 : vector<256x128xf32> to vector<256x128xbf16>
    %c1 = arith.constant 1 : index
    %c0_7 = arith.constant 0 : index
    %c0_8 = arith.constant 0 : index
    %12 = vector.load %arg1[%c1, %c0_7, %c0_8] : memref<8x128x128xbf16, #tpu.memory_space<vmem>>, vector<1x128x128xbf16>
    %13 = vector.shape_cast %12 : vector<1x128x128xbf16> to vector<128x128xbf16>
    %cst_9 = arith.constant dense<0.000000e+00> : vector<256x128xf32>
    %14 = tpu.matmul %11, %13, %cst_9 {dimension_numbers = #tpu.dot_dimension_numbers<[1], [0], [0], [1], [0, 0, 1, 1], [], []>} : vector<256x128xbf16>, vector<128x128xbf16>, vector<256x128xf32> -> vector<256x128xf32>
    %15 = vector.extract_strided_slice %0 {offsets = [1, 0], sizes = [1, 128], strides = [1, 1]} : vector<8x128xf32> to vector<1x128xf32>
    %16 = vector.broadcast %15 : vector<1x128xf32> to vector<256x128xf32>
    %17 = arith.addf %14, %16 : vector<256x128xf32>
    %cst_10 = arith.constant 0.000000e+00 : f32
    %18 = vector.broadcast %cst_10 : f32 to vector<256x128xf32>
    %19 = arith.maximumf %17, %18 : vector<256x128xf32>
    %20 = arith.truncf %19 : vector<256x128xf32> to vector<256x128xbf16>
    %c2 = arith.constant 2 : index
    %c0_11 = arith.constant 0 : index
    %c0_12 = arith.constant 0 : index
    %21 = vector.load %arg1[%c2, %c0_11, %c0_12] : memref<8x128x128xbf16, #tpu.memory_space<vmem>>, vector<1x128x128xbf16>
    %22 = vector.shape_cast %21 : vector<1x128x128xbf16> to vector<128x128xbf16>
    %cst_13 = arith.constant dense<0.000000e+00> : vector<256x128xf32>
    %23 = tpu.matmul %20, %22, %cst_13 {dimension_numbers = #tpu.dot_dimension_numbers<[1], [0], [0], [1], [0, 0, 1, 1], [], []>} : vector<256x128xbf16>, vector<128x128xbf16>, vector<256x128xf32> -> vector<256x128xf32>
    %24 = vector.extract_strided_slice %0 {offsets = [2, 0], sizes = [1, 128], strides = [1, 1]} : vector<8x128xf32> to vector<1x128xf32>
    %25 = vector.broadcast %24 : vector<1x128xf32> to vector<256x128xf32>
    %26 = arith.addf %23, %25 : vector<256x128xf32>
    %cst_14 = arith.constant 0.000000e+00 : f32
    %27 = vector.broadcast %cst_14 : f32 to vector<256x128xf32>
    %28 = arith.maximumf %26, %27 : vector<256x128xf32>
    %29 = arith.truncf %28 : vector<256x128xf32> to vector<256x128xbf16>
    %c3 = arith.constant 3 : index
    %c0_15 = arith.constant 0 : index
    %c0_16 = arith.constant 0 : index
    %30 = vector.load %arg1[%c3, %c0_15, %c0_16] : memref<8x128x128xbf16, #tpu.memory_space<vmem>>, vector<1x128x128xbf16>
    %31 = vector.shape_cast %30 : vector<1x128x128xbf16> to vector<128x128xbf16>
    %cst_17 = arith.constant dense<0.000000e+00> : vector<256x128xf32>
    %32 = tpu.matmul %29, %31, %cst_17 {dimension_numbers = #tpu.dot_dimension_numbers<[1], [0], [0], [1], [0, 0, 1, 1], [], []>} : vector<256x128xbf16>, vector<128x128xbf16>, vector<256x128xf32> -> vector<256x128xf32>
    %33 = vector.extract_strided_slice %0 {offsets = [3, 0], sizes = [1, 128], strides = [1, 1]} : vector<8x128xf32> to vector<1x128xf32>
    %34 = vector.broadcast %33 : vector<1x128xf32> to vector<256x128xf32>
    %35 = arith.addf %32, %34 : vector<256x128xf32>
    %36 = arith.negf %35 : vector<256x128xf32>
    %37 = math.exp %36 : vector<256x128xf32>
    %cst_18 = arith.constant 1.000000e+00 : f32
    %38 = vector.broadcast %cst_18 : f32 to vector<256x128xf32>
    %39 = arith.addf %38, %37 : vector<256x128xf32>
    %40 = arith.divf %38, %39 : vector<256x128xf32>
    %41 = vector.extract_strided_slice %40 {offsets = [0, 0], sizes = [256, 16], strides = [1, 1]} : vector<256x128xf32> to vector<256x16xf32>
    %c0_19 = arith.constant 0 : index
    %c0_20 = arith.constant 0 : index
    %42 = vector.load %arg4[%c0_19, %c0_20] : memref<256x16xf32, #tpu.memory_space<vmem>>, vector<256x16xf32>
    tpu.vector_store %arg4[%c0_19, %c0_20], %41 {strides = array<i32>} : memref<256x16xf32, #tpu.memory_space<vmem>>, vector<256x16xf32>,
    %cst_21 = arith.constant 5.000000e-01 : f32
    %43 = vector.broadcast %cst_21 : f32 to vector<256x128xf32>
    %44 = arith.cmpf ogt, %40, %43 : vector<256x128xf32>
    %45 = arith.extui %44 : vector<256x128xi1> to vector<256x128xi32>
    %46 = arith.sitofp %45 : vector<256x128xi32> to vector<256x128xf32>
    %47 = arith.truncf %46 : vector<256x128xf32> to vector<256x128xbf16>
    %c4 = arith.constant 4 : index
    %c0_22 = arith.constant 0 : index
    %c0_23 = arith.constant 0 : index
    %48 = vector.load %arg1[%c4, %c0_22, %c0_23] : memref<8x128x128xbf16, #tpu.memory_space<vmem>>, vector<1x128x128xbf16>
    %49 = vector.shape_cast %48 : vector<1x128x128xbf16> to vector<128x128xbf16>
    %cst_24 = arith.constant dense<0.000000e+00> : vector<256x128xf32>
    %50 = tpu.matmul %47, %49, %cst_24 {dimension_numbers = #tpu.dot_dimension_numbers<[1], [0], [0], [1], [0, 0, 1, 1], [], []>} : vector<256x128xbf16>, vector<128x128xbf16>, vector<256x128xf32> -> vector<256x128xf32>
    %51 = vector.extract_strided_slice %0 {offsets = [4, 0], sizes = [1, 128], strides = [1, 1]} : vector<8x128xf32> to vector<1x128xf32>
    %52 = vector.broadcast %51 : vector<1x128xf32> to vector<256x128xf32>
    %53 = arith.addf %50, %52 : vector<256x128xf32>
    %cst_25 = arith.constant 0.000000e+00 : f32
    %54 = vector.broadcast %cst_25 : f32 to vector<256x128xf32>
    %55 = arith.maximumf %53, %54 : vector<256x128xf32>
    %56 = arith.truncf %55 : vector<256x128xf32> to vector<256x128xbf16>
    %c5 = arith.constant 5 : index
    %c0_26 = arith.constant 0 : index
    %c0_27 = arith.constant 0 : index
    %57 = vector.load %arg1[%c5, %c0_26, %c0_27] : memref<8x128x128xbf16, #tpu.memory_space<vmem>>, vector<1x128x128xbf16>
    %58 = vector.shape_cast %57 : vector<1x128x128xbf16> to vector<128x128xbf16>
    %cst_28 = arith.constant dense<0.000000e+00> : vector<256x128xf32>
    %59 = tpu.matmul %56, %58, %cst_28 {dimension_numbers = #tpu.dot_dimension_numbers<[1], [0], [0], [1], [0, 0, 1, 1], [], []>} : vector<256x128xbf16>, vector<128x128xbf16>, vector<256x128xf32> -> vector<256x128xf32>
    %60 = vector.extract_strided_slice %0 {offsets = [5, 0], sizes = [1, 128], strides = [1, 1]} : vector<8x128xf32> to vector<1x128xf32>
    %61 = vector.broadcast %60 : vector<1x128xf32> to vector<256x128xf32>
    %62 = arith.addf %59, %61 : vector<256x128xf32>
    %cst_29 = arith.constant 0.000000e+00 : f32
    %63 = vector.broadcast %cst_29 : f32 to vector<256x128xf32>
    %64 = arith.maximumf %62, %63 : vector<256x128xf32>
    %65 = arith.truncf %64 : vector<256x128xf32> to vector<256x128xbf16>
    %c6 = arith.constant 6 : index
    %c0_30 = arith.constant 0 : index
    %c0_31 = arith.constant 0 : index
    %66 = vector.load %arg1[%c6, %c0_30, %c0_31] : memref<8x128x128xbf16, #tpu.memory_space<vmem>>, vector<1x128x128xbf16>
    %67 = vector.shape_cast %66 : vector<1x128x128xbf16> to vector<128x128xbf16>
    %cst_32 = arith.constant dense<0.000000e+00> : vector<256x128xf32>
    %68 = tpu.matmul %65, %67, %cst_32 {dimension_numbers = #tpu.dot_dimension_numbers<[1], [0], [0], [1], [0, 0, 1, 1], [], []>} : vector<256x128xbf16>, vector<128x128xbf16>, vector<256x128xf32> -> vector<256x128xf32>
    %69 = vector.extract_strided_slice %0 {offsets = [6, 0], sizes = [1, 128], strides = [1, 1]} : vector<8x128xf32> to vector<1x128xf32>
    %70 = vector.broadcast %69 : vector<1x128xf32> to vector<256x128xf32>
    %71 = arith.addf %68, %70 : vector<256x128xf32>
    %cst_33 = arith.constant 0.000000e+00 : f32
    %72 = vector.broadcast %cst_33 : f32 to vector<256x128xf32>
    %73 = arith.maximumf %71, %72 : vector<256x128xf32>
    %74 = arith.truncf %73 : vector<256x128xf32> to vector<256x128xbf16>
    %c7 = arith.constant 7 : index
    %c0_34 = arith.constant 0 : index
    %c0_35 = arith.constant 0 : index
    %75 = vector.load %arg1[%c7, %c0_34, %c0_35] : memref<8x128x128xbf16, #tpu.memory_space<vmem>>, vector<1x128x128xbf16>
    %76 = vector.shape_cast %75 : vector<1x128x128xbf16> to vector<128x128xbf16>
    %cst_36 = arith.constant dense<0.000000e+00> : vector<256x128xf32>
    %77 = tpu.matmul %74, %76, %cst_36 {dimension_numbers = #tpu.dot_dimension_numbers<[1], [0], [0], [1], [0, 0, 1, 1], [], []>} : vector<256x128xbf16>, vector<128x128xbf16>, vector<256x128xf32> -> vector<256x128xf32>
    %78 = vector.extract_strided_slice %0 {offsets = [7, 0], sizes = [1, 128], strides = [1, 1]} : vector<8x128xf32> to vector<1x128xf32>
    %79 = vector.broadcast %78 : vector<1x128xf32> to vector<256x128xf32>
    %80 = arith.addf %77, %79 : vector<256x128xf32>
    %81 = vector.extract_strided_slice %80 {offsets = [0, 0], sizes = [256, 16], strides = [1, 1]} : vector<256x128xf32> to vector<256x16xf32>
    %c0_37 = arith.constant 0 : index
    %c0_38 = arith.constant 0 : index
    %82 = vector.load %arg5[%c0_37, %c0_38] : memref<256x16xf32, #tpu.memory_space<vmem>>, vector<256x16xf32>
    tpu.vector_store %arg5[%c0_37, %c0_38], %81 {strides = array<i32>} : memref<256x16xf32, #tpu.memory_space<vmem>>, vector<256x16xf32>,
    return
  }
  func.func @transform_0(%arg0: i32) -> (i32, i32, i32) {
    %c0_i32 = arith.constant 0 : i32
    %c0_i32_0 = arith.constant 0 : i32
    %c0_i32_1 = arith.constant 0 : i32
    %c0_i32_2 = arith.constant 0 : i32
    return %c0_i32, %c0_i32_0, %c0_i32_1 : i32, i32, i32
  }
  func.func @transform_1(%arg0: i32) -> (i32, i32) {
    %c0_i32 = arith.constant 0 : i32
    %c0_i32_0 = arith.constant 0 : i32
    %c0_i32_1 = arith.constant 0 : i32
    return %c0_i32, %c0_i32_0 : i32, i32
  }
  func.func @transform_2(%arg0: i32) -> (i32, i32) {
    %c0_i32 = arith.constant 0 : i32
    %c0_i32_0 = arith.constant 0 : i32
    return %arg0, %c0_i32 : i32, i32
  }
  func.func @transform_3(%arg0: i32) -> (i32, i32) {
    %c0_i32 = arith.constant 0 : i32
    %c0_i32_0 = arith.constant 0 : i32
    return %arg0, %c0_i32 : i32, i32
  }
  func.func @transform_4(%arg0: i32) -> (i32, i32) {
    %c0_i32 = arith.constant 0 : i32
    %c0_i32_0 = arith.constant 0 : i32
    return %arg0, %c0_i32 : i32, i32
  }
}

</mosaic_0001>

<llo_original>
// kernel: _forward_impl.1
$region0: #{_forward_impl.1}
  #allocation0 [shape = 'u32[]', space=smem, size = 0x4, offset = 0x4, fixed_abs, tag = 'smem constant byte address 0x4 - core index']
  #allocation1 [shape = 'u32[144,128]{1,0:T(1,128)}', space=vmem, size = 0x12000, scoped, tag = 'internal scratch']
  %s0 = inlined_call_operand.vmem [shape: bf16[8,128,128], index: 0, kind: input, shape index: {}]
  %s1 = inlined_call_operand.vmem [shape: f32[8,128], index: 1, kind: input, shape index: {}]
  %s2 = inlined_call_operand.vmem [shape: f32[512,16], index: 2, kind: input, shape index: {}]
  %s3 = inlined_call_operand.vmem [shape: f32[512,16], index: 3, kind: output, shape index: {0}]
  %s4 = inlined_call_operand.vmem [shape: f32[512,16], index: 4, kind: output, shape index: {1}]
  %5 = xla_tuple %s3, %s4
  %s6 = sld [smem:[#allocation0]]
  $region53: #{_forward_impl.1} parent=0
    _
  %s8 = ssub.s32 1, %s6
  %s9 = scalar_select 0, %s8, %s6
  loop: start=0, step=1, limit=4
  $region2: #{_forward_impl.1} parent=0 // loop_pre_header
    _
  $region3: #{_forward_impl.1} parent=0 // loop_header
    %s11 = sphi 0, %s15
    %p12 = scmp.ge.s32.totalorder %s11, 4
    %s19 = sphi 0, %s19
    %s21 = sphi 0, %s19
    %s22 = sphi 0, %s21
    %s36 = sphi 0, %s22
    %s40 = sphi 0, %s40
    %s42 = sphi 0, %s40
    %s43 = sphi 0, %s42
    %s57 = sphi 0, %s43
    %s63 = sphi 0, %s65
    %s66 = sphi 0, %s63
    %s67 = sphi 0, %s66
    %s83 = sphi 0, %s67
    %s89 = sphi 0, %s91
    %s92 = sphi 0, %s89
    %s93 = sphi 0, %s92
    %s109 = sphi 0, %s93
    %s115 = sphi 0, %s117
    %s118 = sphi 0, %s115
    %s119 = sphi 0, %s118
    %s135 = sphi 0, %s119
  $region4: #{_forward_impl.1} parent=0 // loop_header_branch
    %14 = sbr.rel (%p12) target = $region8
  $region5: #{_forward_impl.1} parent=0 // loop_body
    %s16 = ssub.s32 %s11, 1
    %s17 = ssub.s32 %s11, 2
    %s18 = sadd.s32 %s11, 1
    %s20 = sadd.s32 %s19, 1
    %p23 = scmp.eq.s32.totalorder %s11, 1
    %p24 = scmp.ne.s32.totalorder %s19, %s21
    %p25 = scmp.eq.s32.totalorder %s11, 0
    %p26 = por %p24, %p25
    %p27 = scmp.ne.s32.totalorder %s19, %s21
    %p28 = scmp.eq.s32.totalorder %s16, 1
    %p29 = por %p27, %p28
    %p30 = scmp.ne.s32.totalorder %s21, %s22
    %p31 = scmp.eq.s32.totalorder %s16, 0
    %p32 = por %p30, %p31
    %p33 = scmp.ne.s32.totalorder %s21, %s22
    %p34 = scmp.eq.s32.totalorder %s17, 1
    %p35 = por %p33, %p34
    %p37 = scmp.ne.s32.totalorder %s22, %s36
    %p38 = scmp.eq.s32.totalorder %s17, 0
    %p39 = por %p37, %p38
    %s41 = sadd.s32 %s40, 1
    %p44 = scmp.eq.s32.totalorder %s11, 1
    %p45 = scmp.ne.s32.totalorder %s40, %s42
    %p46 = scmp.eq.s32.totalorder %s11, 0
    %p47 = por %p45, %p46
    %p48 = scmp.ne.s32.totalorder %s40, %s42
    %p49 = scmp.eq.s32.totalorder %s16, 1
    %p50 = por %p48, %p49
    %p51 = scmp.ne.s32.totalorder %s42, %s43
    %p52 = scmp.eq.s32.totalorder %s16, 0
    %p53 = por %p51, %p52
    %p54 = scmp.ne.s32.totalorder %s42, %s43
    %p55 = scmp.eq.s32.totalorder %s17, 1
    %p56 = por %p54, %p55
    %p58 = scmp.ne.s32.totalorder %s43, %s57
    %p59 = scmp.eq.s32.totalorder %s17, 0
    %p60 = por %p58, %p59
    %s61 = ssub.s32 %s11, %s18
    %p62 = scmp.eq.s32.totalorder %s61, 0
    %s64 = sadd.s32 %s63, 1
    %s65 = scalar_select %p62, %s63, %s64
    %p68 = pneg %p62
    %p69 = scmp.eq.s32.totalorder %s11, 1
    %p70 = por %p68, %p69
    %p71 = scmp.ne.s32.totalorder %s63, %s66
    %p72 = scmp.eq.s32.totalorder %s11, 0
    %p73 = por %p71, %p72
    %p74 = scmp.ne.s32.totalorder %s63, %s66
    %p75 = scmp.eq.s32.totalorder %s16, 1
    %p76 = por %p74, %p75
    %p77 = scmp.ne.s32.totalorder %s66, %s67
    %p78 = scmp.eq.s32.totalorder %s16, 0
    %p79 = por %p77, %p78
    %p80 = scmp.ne.s32.totalorder %s66, %s67
    %p81 = scmp.eq.s32.totalorder %s17, 1
    %p82 = por %p80, %p81
    %p84 = scmp.ne.s32.totalorder %s67, %s83
    %p85 = scmp.eq.s32.totalorder %s17, 0
    %p86 = por %p84, %p85
    %s87 = ssub.s32 %s11, %s18
    %p88 = scmp.eq.s32.totalorder %s87, 0
    %s90 = sadd.s32 %s89, 1
    %s91 = scalar_select %p88, %s89, %s90
    %p94 = pneg %p88
    %p95 = scmp.eq.s32.totalorder %s11, 1
    %p96 = por %p94, %p95
    %p97 = scmp.ne.s32.totalorder %s89, %s92
    %p98 = scmp.eq.s32.totalorder %s11, 0
    %p99 = por %p97, %p98
    %p100 = scmp.ne.s32.totalorder %s89, %s92
    %p101 = scmp.eq.s32.totalorder %s16, 1
    %p102 = por %p100, %p101
    %p103 = scmp.ne.s32.totalorder %s92, %s93
    %p104 = scmp.eq.s32.totalorder %s16, 0
    %p105 = por %p103, %p104
    %p106 = scmp.ne.s32.totalorder %s92, %s93
    %p107 = scmp.eq.s32.totalorder %s17, 1
    %p108 = por %p106, %p107
    %p110 = scmp.ne.s32.totalorder %s93, %s109
    %p111 = scmp.eq.s32.totalorder %s17, 0
    %p112 = por %p110, %p111
    %s113 = ssub.s32 %s11, %s18
    %p114 = scmp.eq.s32.totalorder %s113, 0
    %s116 = sadd.s32 %s115, 1
    %s117 = scalar_select %p114, %s115, %s116
    %p120 = pneg %p114
    %p121 = scmp.eq.s32.totalorder %s11, 1
    %p122 = por %p120, %p121
    %p123 = scmp.ne.s32.totalorder %s115, %s118
    %p124 = scmp.eq.s32.totalorder %s11, 0
    %p125 = por %p123, %p124
    %p126 = scmp.ne.s32.totalorder %s115, %s118
    %p127 = scmp.eq.s32.totalorder %s16, 1
    %p128 = por %p126, %p127
    %p129 = scmp.ne.s32.totalorder %s118, %s119
    %p130 = scmp.eq.s32.totalorder %s16, 0
    %p131 = por %p129, %p130
    %p132 = scmp.ne.s32.totalorder %s118, %s119
    %p133 = scmp.eq.s32.totalorder %s17, 1
    %p134 = por %p132, %p133
    %p136 = scmp.ne.s32.totalorder %s119, %s135
    %p137 = scmp.eq.s32.totalorder %s17, 0
    %p138 = por %p136, %p137
    %p139 = scmp.le.s32.totalorder 1, %s11
    %p140 = scmp.lt.s32.totalorder %s11, 3
    %p141 = pnand %p139, %p140
    %p142 = pneg %p141
    // Predicated region
    $region9: #{_forward_impl.1} parent=5 // pred_check
      _
    $region10: #{_forward_impl.1} parent=5 // pred_check_branch
      %144 = sbr.rel (%p141) target = $region12
    $region11: #{_forward_impl.1} parent=5 // pred_region
      %s145 = ssub.s32 %s11, 1
      // Predicated region
      $region13: #{_forward_impl.1} parent=11 // pred_check
        %p146 = pneg %p32
      $region14: #{_forward_impl.1} parent=11 // pred_check_branch
        %148 = sbr.rel (%p146) target = $region16
      $region15: #{_forward_impl.1} parent=11 // pred_region
        _
      $region16: #{_forward_impl.1} parent=11 // pred_fallthru
        _
      // Predicated region
      $region17: #{_forward_impl.1} parent=11 // pred_check
        %p149 = pneg %p53
      $region18: #{_forward_impl.1} parent=11 // pred_check_branch
        %151 = sbr.rel (%p149) target = $region20
      $region19: #{_forward_impl.1} parent=11 // pred_region
        _
      $region20: #{_forward_impl.1} parent=11 // pred_fallthru
        _
    $region12: #{_forward_impl.1} parent=5 // pred_fallthru
      _
    %p152 = scmp.lt.s32.totalorder %s11, 2
    // Predicated region
    $region21: #{_forward_impl.1} parent=5 // pred_check
      %p153 = pneg %p152
    $region22: #{_forward_impl.1} parent=5 // pred_check_branch
      %155 = sbr.rel (%p153) target = $region24
    $region23: #{_forward_impl.1} parent=5 // pred_region
      // Predicated region
      $region25: #{_forward_impl.1} parent=23 // pred_check
        %p156 = pneg %p73
      $region26: #{_forward_impl.1} parent=23 // pred_check_branch
        %158 = sbr.rel (%p156) target = $region28
      $region27: #{_forward_impl.1} parent=23 // pred_region
        %s159 = smul.u32 32, %s11
        %p160 = scmp.lt.s32.totalorder %s159, 63
        %s161 = scalar_select %p160, %s159, 63
        %s162 = smul.addr %s161, 8
        %s163 = scalar_lea.vmem %s2, %s162
        %s164 = smul.u32 32, %s11
      $region28: #{_forward_impl.1} parent=23 // pred_fallthru
        _
    $region24: #{_forward_impl.1} parent=5 // pred_fallthru
      _
    %p165 = scmp.le.s32.totalorder 1, %s11
    %p166 = scmp.lt.s32.totalorder %s11, 3
    %p167 = pnand %p165, %p166
    %p168 = pneg %p167
    // Predicated region
    $region29: #{_forward_impl.1} parent=5 // pred_check
      _
    $region30: #{_forward_impl.1} parent=5 // pred_check_branch
      %170 = sbr.rel (%p167) target = $region32
    $region31: #{_forward_impl.1} parent=5 // pred_region
      %s171 = ssub.s32 %s11, 1
      %p172 = pneg %p32
      %p173 = pneg %p29
      %p174 = pneg %p53
      %p175 = pneg %p50
      %s176 = smul.u32 32, %s16
      %p177 = scmp.lt.s32.totalorder %s176, 63
      %s178 = scalar_select %p177, %s176, 63
      %s179 = smul.addr %s178, 8
      %s180 = scalar_lea.vmem %s2, %s179
      %p181 = pneg %p79
      %p182 = pneg %p76
      %p183 = pneg %p105
      %p184 = pneg %p102
      %s185 = smul.u32 32, %s16
      %p186 = scmp.lt.s32.totalorder %s185, 63
      %s187 = scalar_select %p186, %s185, 63
      %s188 = smul.addr %s187, 8
      %s189 = scalar_lea.vmem %s3, %s188
      %p190 = pneg %p131
      %p191 = pneg %p128
      %s192 = smul.u32 32, %s16
      %p193 = scmp.lt.s32.totalorder %s192, 63
      %s194 = scalar_select %p193, %s192, 63
      %s195 = smul.addr %s194, 8
      %s196 = scalar_lea.vmem %s4, %s195
      %s197 = smul.u32 32, %s16
      %p198 = scmp.lt.s32.totalorder %s197, 63
      %s199 = scalar_select %p198, %s197, 63
      %s200 = smul.addr %s199, 8
      %s201 = scalar_lea.vmem %s2, %s200
      %s202 = smul.u32 32, %s16
      %s203 = smul.u32 32, %s16
      %p204 = scmp.lt.s32.totalorder %s203, 63
      %s205 = scalar_select %p204, %s203, 63
      %s206 = smul.addr %s205, 8
      %s207 = scalar_lea.vmem %s3, %s206
      %s208 = smul.u32 32, %s16
      %s209 = smul.u32 32, %s16
      %p210 = scmp.lt.s32.totalorder %s209, 63
      %s211 = scalar_select %p210, %s209, 63
      %s212 = smul.addr %s211, 8
      %s213 = scalar_lea.vmem %s4, %s212
      %s214 = smul.u32 32, %s16
      %v216 = vld [vmem:[%s1] sm:$0xff]
      %v217 = vld [vmem:[%s201] sm:$0xff]
      %v218 = vld [vmem:[%s201 + $0x8] sm:$0xff]
      %v219 = vld [vmem:[%s201 + $0x10] sm:$0xff]
      %v220 = vld [vmem:[%s201 + $0x18] sm:$0xff]
      %v221 = vld [vmem:[%s201 + $0x20] sm:$0xff]
      %v222 = vld [vmem:[%s201 + $0x28] sm:$0xff]
      %v223 = vld [vmem:[%s201 + $0x30] sm:$0xff]
      %v224 = vld [vmem:[%s201 + $0x38] sm:$0xff]
      %v225 = vld [vmem:[%s201 + $0x40] sm:$0xff]
      %v226 = vld [vmem:[%s201 + $0x48] sm:$0xff]
      %v227 = vld [vmem:[%s201 + $0x50] sm:$0xff]
      %v228 = vld [vmem:[%s201 + $0x58] sm:$0xff]
      %v229 = vld [vmem:[%s201 + $0x60] sm:$0xff]
      %v230 = vld [vmem:[%s201 + $0x68] sm:$0xff]
      %v231 = vld [vmem:[%s201 + $0x70] sm:$0xff]
      %v232 = vld [vmem:[%s201 + $0x78] sm:$0xff]
      %v233 = vld [vmem:[%s201 + $0x80] sm:$0xff]
      %v234 = vld [vmem:[%s201 + $0x88] sm:$0xff]
      %v235 = vld [vmem:[%s201 + $0x90] sm:$0xff]
      %v236 = vld [vmem:[%s201 + $0x98] sm:$0xff]
      %v237 = vld [vmem:[%s201 + $0xa0] sm:$0xff]
      %v238 = vld [vmem:[%s201 + $0xa8] sm:$0xff]
      %v239 = vld [vmem:[%s201 + $0xb0] sm:$0xff]
      %v240 = vld [vmem:[%s201 + $0xb8] sm:$0xff]
      %v241 = vld [vmem:[%s201 + $0xc0] sm:$0xff]
      %v242 = vld [vmem:[%s201 + $0xc8] sm:$0xff]
      %v243 = vld [vmem:[%s201 + $0xd0] sm:$0xff]
      %v244 = vld [vmem:[%s201 + $0xd8] sm:$0xff]
      %v245 = vld [vmem:[%s201 + $0xe0] sm:$0xff]
      %v246 = vld [vmem:[%s201 + $0xe8] sm:$0xff]
      %v247 = vld [vmem:[%s201 + $0xf0] sm:$0xff]
      %v248 = vld [vmem:[%s201 + $0xf8] sm:$0xff]
      %v249 = vpack.c.bf16 %v218, %v217
      %v250 = vpack.c.bf16 %v220, %v219
      %v251 = vpack.c.bf16 %v222, %v221
      %v252 = vpack.c.bf16 %v224, %v223
      %v253 = vpack.c.bf16 %v226, %v225
      %v254 = vpack.c.bf16 %v228, %v227
      %v255 = vpack.c.bf16 %v230, %v229
      %v256 = vpack.c.bf16 %v232, %v231
      %v257 = vpack.c.bf16 %v234, %v233
      %v258 = vpack.c.bf16 %v236, %v235
      %v259 = vpack.c.bf16 %v238, %v237
      %v260 = vpack.c.bf16 %v240, %v239
      %v261 = vpack.c.bf16 %v242, %v241
      %v262 = vpack.c.bf16 %v244, %v243
      %v263 = vpack.c.bf16 %v246, %v245
      %v264 = vpack.c.bf16 %v248, %v247
      %v265 = vld [vmem:[%s0] sm:$0xf]
      %v266 = vld [vmem:[%s0 + $0x4] sm:$0xf]
      %v267 = vlaneseq
      %v268 = vshrl.u32 %v267, 7
      %v269 = vsub.s32 0, %v268
      %v270 = vrot.slane %v216, %v269
      %v273 = vunpack.c.l.b16 %v265
      %v274 = vunpack.c.l.b16 %v266
      %v275 = vpack.c.b16 %v274, %v273
      %vm277 = vcmask 130048
      %v279 = vsel %vm277, %v249, 0
      %v282 = vsel %vm277, %v250, 0
      %v285 = vsel %vm277, %v251, 0
      %v288 = vsel %vm277, %v252, 0
      %v291 = vsel %vm277, %v253, 0
      %v294 = vsel %vm277, %v254, 0
      %v297 = vsel %vm277, %v255, 0
      %v300 = vsel %vm277, %v256, 0
      %v303 = vsel %vm277, %v257, 0
      %v306 = vsel %vm277, %v258, 0
      %v309 = vsel %vm277, %v259, 0
      %v312 = vsel %vm277, %v260, 0
      %v315 = vsel %vm277, %v261, 0
      %v318 = vsel %vm277, %v262, 0
      %v321 = vsel %vm277, %v263, 0
      %v324 = vsel %vm277, %v264, 0
      %326 = vmatprep.subr.bf16.mxu0 0
      %327 = vmatpush1.bf16.msra.mxu0 0
      %328 = vmatprep.subr.bf16.mxu0 0
      %329 = vmatpush1.bf16.msra.mxu0 0
      %330 = vmatprep.subr.bf16.mxu0 0
      %331 = vmatpush1.bf16.msra.mxu0 0
      %332 = vmatprep.subr.bf16.mxu0 0
      %333 = vmatpush1.bf16.msra.mxu0 0
      %334 = vmatprep.subr.bf16.mxu0 0
      %335 = vmatpush1.bf16.msra.mxu0 0
      %336 = vmatprep.subr.bf16.mxu0 0
      %337 = vmatpush1.bf16.msra.mxu0 0
      %338 = vmatprep.subr.bf16.mxu0 0
      %339 = vmatpush1.bf16.msra.mxu0 0
      %340 = vmatprep.subr.bf16.mxu0 0
      %341 = vmatpush1.bf16.msra.mxu0 %v275
      %342 = vmatprep.subr.bf16.mxu0 0
      %343 = vmatpush2.bf16.msra.mxu0 0
      %344 = vmatprep.subr.bf16.mxu0 0
      %345 = vmatpush2.bf16.msra.mxu0 0
      %346 = vmatprep.subr.bf16.mxu0 0
      %347 = vmatpush2.bf16.msra.mxu0 0
      %348 = vmatprep.subr.bf16.mxu0 0
      %349 = vmatpush2.bf16.msra.mxu0 0
      %350 = vmatprep.subr.bf16.mxu0 0
      %351 = vmatpush2.bf16.msra.mxu0 0
      %352 = vmatprep.subr.bf16.mxu0 0
      %353 = vmatpush2.bf16.msra.mxu0 0
      %354 = vmatprep.subr.bf16.mxu0 0
      %355 = vmatpush2.bf16.msra.mxu0 0
      %356 = vmatprep.subr.bf16.mxu0 0
      %357 = vmatpush2.bf16.msra.mxu0 0
      %358 = vmatprep.mubr.bf16.mxu0 0
      %359 = vmatmul.mubr.bf16.gmra.mxu0 %v279
      %v360 = vpop.f32.mrf.mxu0
      %v361 = vadd.f32 %v270, %v360
      %v362 = vpop.f32.mrf.mxu0
      %v363 = vpop.f32.mrf.mxu0
      %v364 = vadd.f32 %v270, %v363
      %v365 = vpop.f32.mrf.mxu0
      %366 = vmatprep.mubr.bf16.mxu0 0
      %367 = vmatmul.mubr.bf16.gmra.mxu0 %v282
      %v368 = vpop.f32.mrf.mxu0
      %v369 = vadd.f32 %v270, %v368
      %v370 = vpop.f32.mrf.mxu0
      %v371 = vpop.f32.mrf.mxu0
      %v372 = vadd.f32 %v270, %v371
      %v373 = vpop.f32.mrf.mxu0
      %374 = vmatprep.mubr.bf16.mxu0 0
      %375 = vmatmul.mubr.bf16.gmra.mxu0 %v285
      %v376 = vpop.f32.mrf.mxu0
      %v377 = vadd.f32 %v270, %v376
      %v378 = vpop.f32.mrf.mxu0
      %v379 = vpop.f32.mrf.mxu0
      %v380 = vadd.f32 %v270, %v379
      %v381 = vpop.f32.mrf.mxu0
      %382 = vmatprep.mubr.bf16.mxu0 0
      %383 = vmatmul.mubr.bf16.gmra.mxu0 %v288
      %v384 = vpop.f32.mrf.mxu0
      %v385 = vadd.f32 %v270, %v384
      %v386 = vpop.f32.mrf.mxu0
      %v387 = vpop.f32.mrf.mxu0
      %v388 = vadd.f32 %v270, %v387
      %v389 = vpop.f32.mrf.mxu0
      %390 = vmatprep.mubr.bf16.mxu0 0
      %391 = vmatmul.mubr.bf16.gmra.mxu0 %v291
      %v392 = vpop.f32.mrf.mxu0
      %v393 = vadd.f32 %v270, %v392
      %v394 = vpop.f32.mrf.mxu0
      %v395 = vpop.f32.mrf.mxu0
      %v396 = vadd.f32 %v270, %v395
      %v397 = vpop.f32.mrf.mxu0
      %398 = vmatprep.mubr.bf16.mxu0 0
      %399 = vmatmul.mubr.bf16.gmra.mxu0 %v294
      %v400 = vpop.f32.mrf.mxu0
      %v401 = vadd.f32 %v270, %v400
      %v402 = vpop.f32.mrf.mxu0
      %v403 = vpop.f32.mrf.mxu0
      %v404 = vadd.f32 %v270, %v403
      %v405 = vpop.f32.mrf.mxu0
      %406 = vmatprep.mubr.bf16.mxu0 0
      %407 = vmatmul.mubr.bf16.gmra.mxu0 %v297
      %v408 = vpop.f32.mrf.mxu0
      %v409 = vadd.f32 %v270, %v408
      %v410 = vpop.f32.mrf.mxu0
      %v411 = vpop.f32.mrf.mxu0
      %v412 = vadd.f32 %v270, %v411
      %v413 = vpop.f32.mrf.mxu0
      %414 = vmatprep.mubr.bf16.mxu0 0
      %415 = vmatmul.mubr.bf16.gmra.mxu0 %v300
      %v416 = vpop.f32.mrf.mxu0
      %v417 = vadd.f32 %v270, %v416
      %v418 = vpop.f32.mrf.mxu0
      %v419 = vpop.f32.mrf.mxu0
      %v420 = vadd.f32 %v270, %v419
      %v421 = vpop.f32.mrf.mxu0
      %422 = vmatprep.mubr.bf16.mxu0 0
      %423 = vmatmul.mubr.bf16.gmra.mxu0 %v303
      %v424 = vpop.f32.mrf.mxu0
      %v425 = vadd.f32 %v270, %v424
      %v426 = vpop.f32.mrf.mxu0
      %v427 = vpop.f32.mrf.mxu0
      %v428 = vadd.f32 %v270, %v427
      %v429 = vpop.f32.mrf.mxu0
      %430 = vmatprep.mubr.bf16.mxu0 0
      %431 = vmatmul.mubr.bf16.gmra.mxu0 %v306
      %v432 = vpop.f32.mrf.mxu0
      %v433 = vadd.f32 %v270, %v432
      %v434 = vpop.f32.mrf.mxu0
      %v435 = vpop.f32.mrf.mxu0
      %v436 = vadd.f32 %v270, %v435
      %v437 = vpop.f32.mrf.mxu0
      %438 = vmatprep.mubr.bf16.mxu0 0
      %439 = vmatmul.mubr.bf16.gmra.mxu0 %v309
      %v440 = vpop.f32.mrf.mxu0
      %v441 = vadd.f32 %v270, %v440
      %v442 = vpop.f32.mrf.mxu0
      %v443 = vpop.f32.mrf.mxu0
      %v444 = vadd.f32 %v270, %v443
      %v445 = vpop.f32.mrf.mxu0
      %446 = vmatprep.mubr.bf16.mxu0 0
      %447 = vmatmul.mubr.bf16.gmra.mxu0 %v312
      %v448 = vpop.f32.mrf.mxu0
      %v449 = vadd.f32 %v270, %v448
      %v450 = vpop.f32.mrf.mxu0
      %v451 = vpop.f32.mrf.mxu0
      %v452 = vadd.f32 %v270, %v451
      %v453 = vpop.f32.mrf.mxu0
      %454 = vmatprep.mubr.bf16.mxu0 0
      %455 = vmatmul.mubr.bf16.gmra.mxu0 %v315
      %v456 = vpop.f32.mrf.mxu0
      %v457 = vadd.f32 %v270, %v456
      %v458 = vpop.f32.mrf.mxu0
      %v459 = vpop.f32.mrf.mxu0
      %v460 = vadd.f32 %v270, %v459
      %v461 = vpop.f32.mrf.mxu0
      %462 = vmatprep.mubr.bf16.mxu0 0
      %463 = vmatmul.mubr.bf16.gmra.mxu0 %v318
      %v464 = vpop.f32.mrf.mxu0
      %v465 = vadd.f32 %v270, %v464
      %v466 = vpop.f32.mrf.mxu0
      %v467 = vpop.f32.mrf.mxu0
      %v468 = vadd.f32 %v270, %v467
      %v469 = vpop.f32.mrf.mxu0
      %470 = vmatprep.mubr.bf16.mxu0 0
      %471 = vmatmul.mubr.bf16.gmra.mxu0 %v321
      %v472 = vpop.f32.mrf.mxu0
      %v473 = vadd.f32 %v270, %v472
      %v474 = vpop.f32.mrf.mxu0
      %v475 = vpop.f32.mrf.mxu0
      %v476 = vadd.f32 %v270, %v475
      %v477 = vpop.f32.mrf.mxu0
      %478 = vmatprep.mubr.bf16.mxu0 0
      %479 = vmatmul.mubr.bf16.gmra.mxu0 %v324
      %v480 = vpop.f32.mrf.mxu0
      %v481 = vadd.f32 %v270, %v480
      %v482 = vpop.f32.mrf.mxu0
      %v483 = vpop.f32.mrf.mxu0
      %v484 = vadd.f32 %v270, %v483
      %v485 = vpop.f32.mrf.mxu0
      %486 = vdwg.mxu0
      %v487 = vmax.f32 %v361, 0.0
      %v488 = vmax.f32 %v364, 0.0
      %v489 = vmax.f32 %v369, 0.0
      %v490 = vmax.f32 %v372, 0.0
      %v491 = vmax.f32 %v377, 0.0
      %v492 = vmax.f32 %v380, 0.0
      %v493 = vmax.f32 %v385, 0.0
      %v494 = vmax.f32 %v388, 0.0
      %v495 = vmax.f32 %v393, 0.0
      %v496 = vmax.f32 %v396, 0.0
      %v497 = vmax.f32 %v401, 0.0
      %v498 = vmax.f32 %v404, 0.0
      %v499 = vmax.f32 %v409, 0.0
      %v500 = vmax.f32 %v412, 0.0
      %v501 = vmax.f32 %v417, 0.0
      %v502 = vmax.f32 %v420, 0.0
      %v503 = vmax.f32 %v425, 0.0
      %v504 = vmax.f32 %v428, 0.0
      %v505 = vmax.f32 %v433, 0.0
      %v506 = vmax.f32 %v436, 0.0
      %v507 = vmax.f32 %v441, 0.0
      %v508 = vmax.f32 %v444, 0.0
      %v509 = vmax.f32 %v449, 0.0
      %v510 = vmax.f32 %v452, 0.0
      %v511 = vmax.f32 %v457, 0.0
      %v512 = vmax.f32 %v460, 0.0
      %v513 = vmax.f32 %v465, 0.0
      %v514 = vmax.f32 %v468, 0.0
      %v515 = vmax.f32 %v473, 0.0
      %v516 = vmax.f32 %v476, 0.0
      %v517 = vmax.f32 %v481, 0.0
      %v518 = vmax.f32 %v484, 0.0
      %v519 = vpack.c.bf16 %v488, %v487
      %v520 = vpack.c.bf16 %v490, %v489
      %v521 = vpack.c.bf16 %v492, %v491
      %v522 = vpack.c.bf16 %v494, %v493
      %v523 = vpack.c.bf16 %v496, %v495
      %v524 = vpack.c.bf16 %v498, %v497
      %v525 = vpack.c.bf16 %v500, %v499
      %v526 = vpack.c.bf16 %v502, %v501
      %v527 = vpack.c.bf16 %v504, %v503
      %v528 = vpack.c.bf16 %v506, %v505
      %v529 = vpack.c.bf16 %v508, %v507
      %v530 = vpack.c.bf16 %v510, %v509
      %v531 = vpack.c.bf16 %v512, %v511
      %v532 = vpack.c.bf16 %v514, %v513
      %v533 = vpack.c.bf16 %v516, %v515
      %v534 = vpack.c.bf16 %v518, %v517
      %s535 = scalar_lea.vmem %s0, 64
      %v536 = vld [vmem:[%s535] sm:$0xf]
      %v537 = vld [vmem:[%s535 + $0x4] sm:$0xf]
      %v538 = vld [vmem:[%s535 + $0x8] sm:$0xf]
      %v539 = vld [vmem:[%s535 + $0xc] sm:$0xf]
      %v540 = vld [vmem:[%s535 + $0x10] sm:$0xf]
      %v541 = vld [vmem:[%s535 + $0x14] sm:$0xf]
      %v542 = vld [vmem:[%s535 + $0x18] sm:$0xf]
      %v543 = vld [vmem:[%s535 + $0x1c] sm:$0xf]
      %v544 = vld [vmem:[%s535 + $0x20] sm:$0xf]
      %v545 = vld [vmem:[%s535 + $0x24] sm:$0xf]
      %v546 = vld [vmem:[%s535 + $0x28] sm:$0xf]
      %v547 = vld [vmem:[%s535 + $0x2c] sm:$0xf]
      %v548 = vld [vmem:[%s535 + $0x30] sm:$0xf]
      %v549 = vld [vmem:[%s535 + $0x34] sm:$0xf]
      %v550 = vld [vmem:[%s535 + $0x38] sm:$0xf]
      %v551 = vld [vmem:[%s535 + $0x3c] sm:$0xf]
      %v552 = vlaneseq
      %v553 = vshrl.u32 %v552, 7
      %v554 = vsub.s32 1, %v553
      %v555 = vrot.slane %v216, %v554
      %v572 = vunpack.c.l.b16 %v536
      %v573 = vunpack.c.l.b16 %v537
      %v574 = vunpack.c.l.b16 %v538
      %v575 = vunpack.c.l.b16 %v539
      %v576 = vunpack.c.l.b16 %v540
      %v577 = vunpack.c.l.b16 %v541
      %v578 = vunpack.c.l.b16 %v542
      %v579 = vunpack.c.l.b16 %v543
      %v580 = vunpack.c.l.b16 %v544
      %v581 = vunpack.c.l.b16 %v545
      %v582 = vunpack.c.l.b16 %v546
      %v583 = vunpack.c.l.b16 %v547
      %v584 = vunpack.c.l.b16 %v548
      %v585 = vunpack.c.l.b16 %v549
      %v586 = vunpack.c.l.b16 %v550
      %v587 = vunpack.c.l.b16 %v551
      %v588 = vpack.c.b16 %v573, %v572
      %v589 = vpack.c.b16 %v575, %v574
      %v590 = vpack.c.b16 %v577, %v576
      %v591 = vpack.c.b16 %v579, %v578
      %v592 = vpack.c.b16 %v581, %v580
      %v593 = vpack.c.b16 %v583, %v582
      %v594 = vpack.c.b16 %v585, %v584
      %v595 = vpack.c.b16 %v587, %v586
      %604 = vmatprep.subr.bf16.mxu0 0
      %605 = vmatpush1.bf16.msra.mxu0 %v595
      %606 = vmatprep.subr.bf16.mxu0 0
      %607 = vmatpush1.bf16.msra.mxu0 %v594
      %608 = vmatprep.subr.bf16.mxu0 0
      %609 = vmatpush1.bf16.msra.mxu0 %v593
      %610 = vmatprep.subr.bf16.mxu0 0
      %611 = vmatpush1.bf16.msra.mxu0 %v592
      %612 = vmatprep.subr.bf16.mxu0 0
      %613 = vmatpush1.bf16.msra.mxu0 %v591
      %614 = vmatprep.subr.bf16.mxu0 0
      %615 = vmatpush1.bf16.msra.mxu0 %v590
      %616 = vmatprep.subr.bf16.mxu0 0
      %617 = vmatpush1.bf16.msra.mxu0 %v589
      %618 = vmatprep.subr.bf16.mxu0 0
      %619 = vmatpush1.bf16.msra.mxu0 %v588
      %620 = vmatprep.subr.bf16.mxu0 0
      %621 = vmatpush2.bf16.msra.mxu0 0
      %622 = vmatprep.subr.bf16.mxu0 0
      %623 = vmatpush2.bf16.msra.mxu0 0
      %624 = vmatprep.subr.bf16.mxu0 0
      %625 = vmatpush2.bf16.msra.mxu0 0
      %626 = vmatprep.subr.bf16.mxu0 0
      %627 = vmatpush2.bf16.msra.mxu0 0
      %628 = vmatprep.subr.bf16.mxu0 0
      %629 = vmatpush2.bf16.msra.mxu0 0
      %630 = vmatprep.subr.bf16.mxu0 0
      %631 = vmatpush2.bf16.msra.mxu0 0
      %632 = vmatprep.subr.bf16.mxu0 0
      %633 = vmatpush2.bf16.msra.mxu0 0
      %634 = vmatprep.subr.bf16.mxu0 0
      %635 = vmatpush2.bf16.msra.mxu0 0
      %636 = vmatprep.mubr.bf16.mxu0 0
      %637 = vmatmul.mubr.bf16.gmra.mxu0 %v519
      %v638 = vpop.f32.mrf.mxu0
      %v639 = vadd.f32 %v555, %v638
      %v640 = vpop.f32.mrf.mxu0
      %v641 = vpop.f32.mrf.mxu0
      %v642 = vadd.f32 %v555, %v641
      %v643 = vpop.f32.mrf.mxu0
      %644 = vmatprep.mubr.bf16.mxu0 0
      %645 = vmatmul.mubr.bf16.gmra.mxu0 %v520
      %v646 = vpop.f32.mrf.mxu0
      %v647 = vadd.f32 %v555, %v646
      %v648 = vpop.f32.mrf.mxu0
      %v649 = vpop.f32.mrf.mxu0
      %v650 = vadd.f32 %v555, %v649
      %v651 = vpop.f32.mrf.mxu0
      %652 = vmatprep.mubr.bf16.mxu0 0
      %653 = vmatmul.mubr.bf16.gmra.mxu0 %v521
      %v654 = vpop.f32.mrf.mxu0
      %v655 = vadd.f32 %v555, %v654
      %v656 = vpop.f32.mrf.mxu0
      %v657 = vpop.f32.mrf.mxu0
      %v658 = vadd.f32 %v555, %v657
      %v659 = vpop.f32.mrf.mxu0
      %660 = vmatprep.mubr.bf16.mxu0 0
      %661 = vmatmul.mubr.bf16.gmra.mxu0 %v522
      %v662 = vpop.f32.mrf.mxu0
      %v663 = vadd.f32 %v555, %v662
      %v664 = vpop.f32.mrf.mxu0
      %v665 = vpop.f32.mrf.mxu0
      %v666 = vadd.f32 %v555, %v665
      %v667 = vpop.f32.mrf.mxu0
      %668 = vmatprep.mubr.bf16.mxu0 0
      %669 = vmatmul.mubr.bf16.gmra.mxu0 %v523
      %v670 = vpop.f32.mrf.mxu0
      %v671 = vadd.f32 %v555, %v670
      %v672 = vpop.f32.mrf.mxu0
      %v673 = vpop.f32.mrf.mxu0
      %v674 = vadd.f32 %v555, %v673
      %v675 = vpop.f32.mrf.mxu0
      %676 = vmatprep.mubr.bf16.mxu0 0
      %677 = vmatmul.mubr.bf16.gmra.mxu0 %v524
      %v678 = vpop.f32.mrf.mxu0
      %v679 = vadd.f32 %v555, %v678
      %v680 = vpop.f32.mrf.mxu0
      %v681 = vpop.f32.mrf.mxu0
      %v682 = vadd.f32 %v555, %v681
      %v683 = vpop.f32.mrf.mxu0
      %684 = vmatprep.mubr.bf16.mxu0 0
      %685 = vmatmul.mubr.bf16.gmra.mxu0 %v525
      %v686 = vpop.f32.mrf.mxu0
      %v687 = vadd.f32 %v555, %v686
      %v688 = vpop.f32.mrf.mxu0
      %v689 = vpop.f32.mrf.mxu0
      %v690 = vadd.f32 %v555, %v689
      %v691 = vpop.f32.mrf.mxu0
      %692 = vmatprep.mubr.bf16.mxu0 0
      %693 = vmatmul.mubr.bf16.gmra.mxu0 %v526
      %v694 = vpop.f32.mrf.mxu0
      %v695 = vadd.f32 %v555, %v694
      %v696 = vpop.f32.mrf.mxu0
      %v697 = vpop.f32.mrf.mxu0
      %v698 = vadd.f32 %v555, %v697
      %v699 = vpop.f32.mrf.mxu0
      %700 = vmatprep.mubr.bf16.mxu0 0
      %701 = vmatmul.mubr.bf16.gmra.mxu0 %v527
      %v702 = vpop.f32.mrf.mxu0
      %v703 = vadd.f32 %v555, %v702
      %v704 = vpop.f32.mrf.mxu0
      %v705 = vpop.f32.mrf.mxu0
      %v706 = vadd.f32 %v555, %v705
      %v707 = vpop.f32.mrf.mxu0
      %708 = vmatprep.mubr.bf16.mxu0 0
      %709 = vmatmul.mubr.bf16.gmra.mxu0 %v528
      %v710 = vpop.f32.mrf.mxu0
      %v711 = vadd.f32 %v555, %v710
      %v712 = vpop.f32.mrf.mxu0
      %v713 = vpop.f32.mrf.mxu0
      %v714 = vadd.f32 %v555, %v713
      %v715 = vpop.f32.mrf.mxu0
      %716 = vmatprep.mubr.bf16.mxu0 0
      %717 = vmatmul.mubr.bf16.gmra.mxu0 %v529
      %v718 = vpop.f32.mrf.mxu0
      %v719 = vadd.f32 %v555, %v718
      %v720 = vpop.f32.mrf.mxu0
      %v721 = vpop.f32.mrf.mxu0
      %v722 = vadd.f32 %v555, %v721
      %v723 = vpop.f32.mrf.mxu0
      %724 = vmatprep.mubr.bf16.mxu0 0
      %725 = vmatmul.mubr.bf16.gmra.mxu0 %v530
      %v726 = vpop.f32.mrf.mxu0
      %v727 = vadd.f32 %v555, %v726
      %v728 = vpop.f32.mrf.mxu0
      %v729 = vpop.f32.mrf.mxu0
      %v730 = vadd.f32 %v555, %v729
      %v731 = vpop.f32.mrf.mxu0
      %732 = vmatprep.mubr.bf16.mxu0 0
      %733 = vmatmul.mubr.bf16.gmra.mxu0 %v531
      %v734 = vpop.f32.mrf.mxu0
      %v735 = vadd.f32 %v555, %v734
      %v736 = vpop.f32.mrf.mxu0
      %v737 = vpop.f32.mrf.mxu0
      %v738 = vadd.f32 %v555, %v737
      %v739 = vpop.f32.mrf.mxu0
      %740 = vmatprep.mubr.bf16.mxu0 0
      %741 = vmatmul.mubr.bf16.gmra.mxu0 %v532
      %v742 = vpop.f32.mrf.mxu0
      %v743 = vadd.f32 %v555, %v742
      %v744 = vpop.f32.mrf.mxu0
      %v745 = vpop.f32.mrf.mxu0
      %v746 = vadd.f32 %v555, %v745
      %v747 = vpop.f32.mrf.mxu0
      %748 = vmatprep.mubr.bf16.mxu0 0
      %749 = vmatmul.mubr.bf16.gmra.mxu0 %v533
      %v750 = vpop.f32.mrf.mxu0
      %v751 = vadd.f32 %v555, %v750
      %v752 = vpop.f32.mrf.mxu0
      %v753 = vpop.f32.mrf.mxu0
      %v754 = vadd.f32 %v555, %v753
      %v755 = vpop.f32.mrf.mxu0
      %756 = vmatprep.mubr.bf16.mxu0 0
      %757 = vmatmul.mubr.bf16.gmra.mxu0 %v534
      %v758 = vpop.f32.mrf.mxu0
      %v759 = vadd.f32 %v555, %v758
      %v760 = vpop.f32.mrf.mxu0
      %v761 = vpop.f32.mrf.mxu0
      %v762 = vadd.f32 %v555, %v761
      %v763 = vpop.f32.mrf.mxu0
      %764 = vdwg.mxu0
      %v765 = vmax.f32 %v639, 0.0
      %v766 = vmax.f32 %v642, 0.0
      %v767 = vmax.f32 %v647, 0.0
      %v768 = vmax.f32 %v650, 0.0
      %v769 = vmax.f32 %v655, 0.0
      %v770 = vmax.f32 %v658, 0.0
      %v771 = vmax.f32 %v663, 0.0
      %v772 = vmax.f32 %v666, 0.0
      %v773 = vmax.f32 %v671, 0.0
      %v774 = vmax.f32 %v674, 0.0
      %v775 = vmax.f32 %v679, 0.0
      %v776 = vmax.f32 %v682, 0.0
      %v777 = vmax.f32 %v687, 0.0
      %v778 = vmax.f32 %v690, 0.0
      %v779 = vmax.f32 %v695, 0.0
      %v780 = vmax.f32 %v698, 0.0
      %v781 = vmax.f32 %v703, 0.0
      %v782 = vmax.f32 %v706, 0.0
      %v783 = vmax.f32 %v711, 0.0
      %v784 = vmax.f32 %v714, 0.0
      %v785 = vmax.f32 %v719, 0.0
      %v786 = vmax.f32 %v722, 0.0
      %v787 = vmax.f32 %v727, 0.0
      %v788 = vmax.f32 %v730, 0.0
      %v789 = vmax.f32 %v735, 0.0
      %v790 = vmax.f32 %v738, 0.0
      %v791 = vmax.f32 %v743, 0.0
      %v792 = vmax.f32 %v746, 0.0
      %v793 = vmax.f32 %v751, 0.0
      %v794 = vmax.f32 %v754, 0.0
      %v795 = vmax.f32 %v759, 0.0
      %v796 = vmax.f32 %v762, 0.0
      %v797 = vpack.c.bf16 %v766, %v765
      %v798 = vpack.c.bf16 %v768, %v767
      %v799 = vpack.c.bf16 %v770, %v769
      %v800 = vpack.c.bf16 %v772, %v771
      %v801 = vpack.c.bf16 %v774, %v773
      %v802 = vpack.c.bf16 %v776, %v775
      %v803 = vpack.c.bf16 %v778, %v777
      %v804 = vpack.c.bf16 %v780, %v779
      %v805 = vpack.c.bf16 %v782, %v781
      %v806 = vpack.c.bf16 %v784, %v783
      %v807 = vpack.c.bf16 %v786, %v785
      %v808 = vpack.c.bf16 %v788, %v787
      %v809 = vpack.c.bf16 %v790, %v789
      %v810 = vpack.c.bf16 %v792, %v791
      %v811 = vpack.c.bf16 %v794, %v793
      %v812 = vpack.c.bf16 %v796, %v795
      %s813 = scalar_lea.vmem %s0, 128
      %v814 = vld [vmem:[%s813] sm:$0xf]
      %v815 = vld [vmem:[%s813 + $0x4] sm:$0xf]
      %v816 = vld [vmem:[%s813 + $0x8] sm:$0xf]
      %v817 = vld [vmem:[%s813 + $0xc] sm:$0xf]
      %v818 = vld [vmem:[%s813 + $0x10] sm:$0xf]
      %v819 = vld [vmem:[%s813 + $0x14] sm:$0xf]
      %v820 = vld [vmem:[%s813 + $0x18] sm:$0xf]
      %v821 = vld [vmem:[%s813 + $0x1c] sm:$0xf]
      %v822 = vld [vmem:[%s813 + $0x20] sm:$0xf]
      %v823 = vld [vmem:[%s813 + $0x24] sm:$0xf]
      %v824 = vld [vmem:[%s813 + $0x28] sm:$0xf]
      %v825 = vld [vmem:[%s813 + $0x2c] sm:$0xf]
      %v826 = vld [vmem:[%s813 + $0x30] sm:$0xf]
      %v827 = vld [vmem:[%s813 + $0x34] sm:$0xf]
      %v828 = vld [vmem:[%s813 + $0x38] sm:$0xf]
      %v829 = vld [vmem:[%s813 + $0x3c] sm:$0xf]
      %v830 = vlaneseq
      %v831 = vshrl.u32 %v830, 7
      %v832 = vsub.s32 2, %v831
      %v833 = vrot.slane %v216, %v832
      %v850 = vunpack.c.l.b16 %v814
      %v851 = vunpack.c.l.b16 %v815
      %v852 = vunpack.c.l.b16 %v816
      %v853 = vunpack.c.l.b16 %v817
      %v854 = vunpack.c.l.b16 %v818
      %v855 = vunpack.c.l.b16 %v819
      %v856 = vunpack.c.l.b16 %v820
      %v857 = vunpack.c.l.b16 %v821
      %v858 = vunpack.c.l.b16 %v822
      %v859 = vunpack.c.l.b16 %v823
      %v860 = vunpack.c.l.b16 %v824
      %v861 = vunpack.c.l.b16 %v825
      %v862 = vunpack.c.l.b16 %v826
      %v863 = vunpack.c.l.b16 %v827
      %v864 = vunpack.c.l.b16 %v828
      %v865 = vunpack.c.l.b16 %v829
      %v866 = vpack.c.b16 %v851, %v850
      %v867 = vpack.c.b16 %v853, %v852
      %v868 = vpack.c.b16 %v855, %v854
      %v869 = vpack.c.b16 %v857, %v856
      %v870 = vpack.c.b16 %v859, %v858
      %v871 = vpack.c.b16 %v861, %v860
      %v872 = vpack.c.b16 %v863, %v862
      %v873 = vpack.c.b16 %v865, %v864
      %882 = vmatprep.subr.bf16.mxu0 0
      %883 = vmatpush1.bf16.msra.mxu0 %v873
      %884 = vmatprep.subr.bf16.mxu0 0
      %885 = vmatpush1.bf16.msra.mxu0 %v872
      %886 = vmatprep.subr.bf16.mxu0 0
      %887 = vmatpush1.bf16.msra.mxu0 %v871
      %888 = vmatprep.subr.bf16.mxu0 0
      %889 = vmatpush1.bf16.msra.mxu0 %v870
      %890 = vmatprep.subr.bf16.mxu0 0
      %891 = vmatpush1.bf16.msra.mxu0 %v869
      %892 = vmatprep.subr.bf16.mxu0 0
      %893 = vmatpush1.bf16.msra.mxu0 %v868
      %894 = vmatprep.subr.bf16.mxu0 0
      %895 = vmatpush1.bf16.msra.mxu0 %v867
      %896 = vmatprep.subr.bf16.mxu0 0
      %897 = vmatpush1.bf16.msra.mxu0 %v866
      %898 = vmatprep.subr.bf16.mxu0 0
      %899 = vmatpush2.bf16.msra.mxu0 0
      %900 = vmatprep.subr.bf16.mxu0 0
      %901 = vmatpush2.bf16.msra.mxu0 0
      %902 = vmatprep.subr.bf16.mxu0 0
      %903 = vmatpush2.bf16.msra.mxu0 0
      %904 = vmatprep.subr.bf16.mxu0 0
      %905 = vmatpush2.bf16.msra.mxu0 0
      %906 = vmatprep.subr.bf16.mxu0 0
      %907 = vmatpush2.bf16.msra.mxu0 0
      %908 = vmatprep.subr.bf16.mxu0 0
      %909 = vmatpush2.bf16.msra.mxu0 0
      %910 = vmatprep.subr.bf16.mxu0 0
      %911 = vmatpush2.bf16.msra.mxu0 0
      %912 = vmatprep.subr.bf16.mxu0 0
      %913 = vmatpush2.bf16.msra.mxu0 0
      %914 = vmatprep.mubr.bf16.mxu0 0
      %915 = vmatmul.mubr.bf16.gmra.mxu0 %v797
      %v916 = vpop.f32.mrf.mxu0
      %v917 = vadd.f32 %v833, %v916
      %v918 = vpop.f32.mrf.mxu0
      %v919 = vpop.f32.mrf.mxu0
      %v920 = vadd.f32 %v833, %v919
      %v921 = vpop.f32.mrf.mxu0
      %922 = vmatprep.mubr.bf16.mxu0 0
      %923 = vmatmul.mubr.bf16.gmra.mxu0 %v798
      %v924 = vpop.f32.mrf.mxu0
      %v925 = vadd.f32 %v833, %v924
      %v926 = vpop.f32.mrf.mxu0
      %v927 = vpop.f32.mrf.mxu0
      %v928 = vadd.f32 %v833, %v927
      %v929 = vpop.f32.mrf.mxu0
      %930 = vmatprep.mubr.bf16.mxu0 0
      %931 = vmatmul.mubr.bf16.gmra.mxu0 %v799
      %v932 = vpop.f32.mrf.mxu0
      %v933 = vadd.f32 %v833, %v932
      %v934 = vpop.f32.mrf.mxu0
      %v935 = vpop.f32.mrf.mxu0
      %v936 = vadd.f32 %v833, %v935
      %v937 = vpop.f32.mrf.mxu0
      %938 = vmatprep.mubr.bf16.mxu0 0
      %939 = vmatmul.mubr.bf16.gmra.mxu0 %v800
      %v940 = vpop.f32.mrf.mxu0
      %v941 = vadd.f32 %v833, %v940
      %v942 = vpop.f32.mrf.mxu0
      %v943 = vpop.f32.mrf.mxu0
      %v944 = vadd.f32 %v833, %v943
      %v945 = vpop.f32.mrf.mxu0
      %946 = vmatprep.mubr.bf16.mxu0 0
      %947 = vmatmul.mubr.bf16.gmra.mxu0 %v801
      %v948 = vpop.f32.mrf.mxu0
      %v949 = vadd.f32 %v833, %v948
      %v950 = vpop.f32.mrf.mxu0
      %v951 = vpop.f32.mrf.mxu0
      %v952 = vadd.f32 %v833, %v951
      %v953 = vpop.f32.mrf.mxu0
      %954 = vmatprep.mubr.bf16.mxu0 0
      %955 = vmatmul.mubr.bf16.gmra.mxu0 %v802
      %v956 = vpop.f32.mrf.mxu0
      %v957 = vadd.f32 %v833, %v956
      %v958 = vpop.f32.mrf.mxu0
      %v959 = vpop.f32.mrf.mxu0
      %v960 = vadd.f32 %v833, %v959
      %v961 = vpop.f32.mrf.mxu0
      %962 = vmatprep.mubr.bf16.mxu0 0
      %963 = vmatmul.mubr.bf16.gmra.mxu0 %v803
      %v964 = vpop.f32.mrf.mxu0
      %v965 = vadd.f32 %v833, %v964
      %v966 = vpop.f32.mrf.mxu0
      %v967 = vpop.f32.mrf.mxu0
      %v968 = vadd.f32 %v833, %v967
      %v969 = vpop.f32.mrf.mxu0
      %970 = vmatprep.mubr.bf16.mxu0 0
      %971 = vmatmul.mubr.bf16.gmra.mxu0 %v804
      %v972 = vpop.f32.mrf.mxu0
      %v973 = vadd.f32 %v833, %v972
      %v974 = vpop.f32.mrf.mxu0
      %v975 = vpop.f32.mrf.mxu0
      %v976 = vadd.f32 %v833, %v975
      %v977 = vpop.f32.mrf.mxu0
      %978 = vmatprep.mubr.bf16.mxu0 0
      %979 = vmatmul.mubr.bf16.gmra.mxu0 %v805
      %v980 = vpop.f32.mrf.mxu0
      %v981 = vadd.f32 %v833, %v980
      %v982 = vpop.f32.mrf.mxu0
      %v983 = vpop.f32.mrf.mxu0
      %v984 = vadd.f32 %v833, %v983
      %v985 = vpop.f32.mrf.mxu0
      %986 = vmatprep.mubr.bf16.mxu0 0
      %987 = vmatmul.mubr.bf16.gmra.mxu0 %v806
      %v988 = vpop.f32.mrf.mxu0
      %v989 = vadd.f32 %v833, %v988
      %v990 = vpop.f32.mrf.mxu0
      %v991 = vpop.f32.mrf.mxu0
      %v992 = vadd.f32 %v833, %v991
      %v993 = vpop.f32.mrf.mxu0
      %994 = vmatprep.mubr.bf16.mxu0 0
      %995 = vmatmul.mubr.bf16.gmra.mxu0 %v807
      %v996 = vpop.f32.mrf.mxu0
      %v997 = vadd.f32 %v833, %v996
      %v998 = vpop.f32.mrf.mxu0
      %v999 = vpop.f32.mrf.mxu0
      %v1000 = vadd.f32 %v833, %v999
      %v1001 = vpop.f32.mrf.mxu0
      %1002 = vmatprep.mubr.bf16.mxu0 0
      %1003 = vmatmul.mubr.bf16.gmra.mxu0 %v808
      %v1004 = vpop.f32.mrf.mxu0
      %v1005 = vadd.f32 %v833, %v1004
      %v1006 = vpop.f32.mrf.mxu0
      %v1007 = vpop.f32.mrf.mxu0
      %v1008 = vadd.f32 %v833, %v1007
      %v1009 = vpop.f32.mrf.mxu0
      %1010 = vmatprep.mubr.bf16.mxu0 0
      %1011 = vmatmul.mubr.bf16.gmra.mxu0 %v809
      %v1012 = vpop.f32.mrf.mxu0
      %v1013 = vadd.f32 %v833, %v1012
      %v1014 = vpop.f32.mrf.mxu0
      %v1015 = vpop.f32.mrf.mxu0
      %v1016 = vadd.f32 %v833, %v1015
      %v1017 = vpop.f32.mrf.mxu0
      %1018 = vmatprep.mubr.bf16.mxu0 0
      %1019 = vmatmul.mubr.bf16.gmra.mxu0 %v810
      %v1020 = vpop.f32.mrf.mxu0
      %v1021 = vadd.f32 %v833, %v1020
      %v1022 = vpop.f32.mrf.mxu0
      %v1023 = vpop.f32.mrf.mxu0
      %v1024 = vadd.f32 %v833, %v1023
      %v1025 = vpop.f32.mrf.mxu0
      %1026 = vmatprep.mubr.bf16.mxu0 0
      %1027 = vmatmul.mubr.bf16.gmra.mxu0 %v811
      %v1028 = vpop.f32.mrf.mxu0
      %v1029 = vadd.f32 %v833, %v1028
      %v1030 = vpop.f32.mrf.mxu0
      %v1031 = vpop.f32.mrf.mxu0
      %v1032 = vadd.f32 %v833, %v1031
      %v1033 = vpop.f32.mrf.mxu0
      %1034 = vmatprep.mubr.bf16.mxu0 0
      %1035 = vmatmul.mubr.bf16.gmra.mxu0 %v812
      %v1036 = vpop.f32.mrf.mxu0
      %v1037 = vadd.f32 %v833, %v1036
      %v1038 = vpop.f32.mrf.mxu0
      %v1039 = vpop.f32.mrf.mxu0
      %v1040 = vadd.f32 %v833, %v1039
      %v1041 = vpop.f32.mrf.mxu0
      %1042 = vdwg.mxu0
      %v1043 = vmax.f32 %v917, 0.0
      %v1044 = vmax.f32 %v920, 0.0
      %v1045 = vmax.f32 %v925, 0.0
      %v1046 = vmax.f32 %v928, 0.0
      %v1047 = vmax.f32 %v933, 0.0
      %v1048 = vmax.f32 %v936, 0.0
      %v1049 = vmax.f32 %v941, 0.0
      %v1050 = vmax.f32 %v944, 0.0
      %v1051 = vmax.f32 %v949, 0.0
      %v1052 = vmax.f32 %v952, 0.0
      %v1053 = vmax.f32 %v957, 0.0
      %v1054 = vmax.f32 %v960, 0.0
      %v1055 = vmax.f32 %v965, 0.0
      %v1056 = vmax.f32 %v968, 0.0
      %v1057 = vmax.f32 %v973, 0.0
      %v1058 = vmax.f32 %v976, 0.0
      %v1059 = vmax.f32 %v981, 0.0
      %v1060 = vmax.f32 %v984, 0.0
      %v1061 = vmax.f32 %v989, 0.0
      %v1062 = vmax.f32 %v992, 0.0
      %v1063 = vmax.f32 %v997, 0.0
      %v1064 = vmax.f32 %v1000, 0.0
      %v1065 = vmax.f32 %v1005, 0.0
      %v1066 = vmax.f32 %v1008, 0.0
      %v1067 = vmax.f32 %v1013, 0.0
      %v1068 = vmax.f32 %v1016, 0.0
      %v1069 = vmax.f32 %v1021, 0.0
      %v1070 = vmax.f32 %v1024, 0.0
      %v1071 = vmax.f32 %v1029, 0.0
      %v1072 = vmax.f32 %v1032, 0.0
      %v1073 = vmax.f32 %v1037, 0.0
      %v1074 = vmax.f32 %v1040, 0.0
      %v1075 = vpack.c.bf16 %v1044, %v1043
      %v1076 = vpack.c.bf16 %v1046, %v1045
      %v1077 = vpack.c.bf16 %v1048, %v1047
      %v1078 = vpack.c.bf16 %v1050, %v1049
      %v1079 = vpack.c.bf16 %v1052, %v1051
      %v1080 = vpack.c.bf16 %v1054, %v1053
      %v1081 = vpack.c.bf16 %v1056, %v1055
      %v1082 = vpack.c.bf16 %v1058, %v1057
      %v1083 = vpack.c.bf16 %v1060, %v1059
      %v1084 = vpack.c.bf16 %v1062, %v1061
      %v1085 = vpack.c.bf16 %v1064, %v1063
      %v1086 = vpack.c.bf16 %v1066, %v1065
      %v1087 = vpack.c.bf16 %v1068, %v1067
      %v1088 = vpack.c.bf16 %v1070, %v1069
      %v1089 = vpack.c.bf16 %v1072, %v1071
      %v1090 = vpack.c.bf16 %v1074, %v1073
      %s1091 = scalar_lea.vmem %s0, 192
      %v1092 = vld [vmem:[%s1091] sm:$0xf]
      %v1093 = vld [vmem:[%s1091 + $0x4] sm:$0xf]
      %v1094 = vld [vmem:[%s1091 + $0x8] sm:$0xf]
      %v1095 = vld [vmem:[%s1091 + $0xc] sm:$0xf]
      %v1096 = vld [vmem:[%s1091 + $0x10] sm:$0xf]
      %v1097 = vld [vmem:[%s1091 + $0x14] sm:$0xf]
      %v1098 = vld [vmem:[%s1091 + $0x18] sm:$0xf]
      %v1099 = vld [vmem:[%s1091 + $0x1c] sm:$0xf]
      %v1100 = vld [vmem:[%s1091 + $0x20] sm:$0xf]
      %v1101 = vld [vmem:[%s1091 + $0x24] sm:$0xf]
      %v1102 = vld [vmem:[%s1091 + $0x28] sm:$0xf]
      %v1103 = vld [vmem:[%s1091 + $0x2c] sm:$0xf]
      %v1104 = vld [vmem:[%s1091 + $0x30] sm:$0xf]
      %v1105 = vld [vmem:[%s1091 + $0x34] sm:$0xf]
      %v1106 = vld [vmem:[%s1091 + $0x38] sm:$0xf]
      %v1107 = vld [vmem:[%s1091 + $0x3c] sm:$0xf]
      %v1108 = vlaneseq
      %v1109 = vshrl.u32 %v1108, 7
      %v1110 = vsub.s32 3, %v1109
      %v1111 = vrot.slane %v216, %v1110
      %v1128 = vunpack.c.l.b16 %v1092
      %v1129 = vunpack.c.l.b16 %v1093
      %v1130 = vunpack.c.l.b16 %v1094
      %v1131 = vunpack.c.l.b16 %v1095
      %v1132 = vunpack.c.l.b16 %v1096
      %v1133 = vunpack.c.l.b16 %v1097
      %v1134 = vunpack.c.l.b16 %v1098
      %v1135 = vunpack.c.l.b16 %v1099
      %v1136 = vunpack.c.l.b16 %v1100
      %v1137 = vunpack.c.l.b16 %v1101
      %v1138 = vunpack.c.l.b16 %v1102
      %v1139 = vunpack.c.l.b16 %v1103
      %v1140 = vunpack.c.l.b16 %v1104
      %v1141 = vunpack.c.l.b16 %v1105
      %v1142 = vunpack.c.l.b16 %v1106
      %v1143 = vunpack.c.l.b16 %v1107
      %v1144 = vpack.c.b16 %v1129, %v1128
      %v1145 = vpack.c.b16 %v1131, %v1130
      %v1146 = vpack.c.b16 %v1133, %v1132
      %v1147 = vpack.c.b16 %v1135, %v1134
      %v1148 = vpack.c.b16 %v1137, %v1136
      %v1149 = vpack.c.b16 %v1139, %v1138
      %v1150 = vpack.c.b16 %v1141, %v1140
      %v1151 = vpack.c.b16 %v1143, %v1142
      %1160 = vmatprep.subr.bf16.mxu0 0
      %1161 = vmatpush1.bf16.msra.mxu0 %v1151
      %1162 = vmatprep.subr.bf16.mxu0 0
      %1163 = vmatpush1.bf16.msra.mxu0 %v1150
      %1164 = vmatprep.subr.bf16.mxu0 0
      %1165 = vmatpush1.bf16.msra.mxu0 %v1149
      %1166 = vmatprep.subr.bf16.mxu0 0
      %1167 = vmatpush1.bf16.msra.mxu0 %v1148
      %1168 = vmatprep.subr.bf16.mxu0 0
      %1169 = vmatpush1.bf16.msra.mxu0 %v1147
      %1170 = vmatprep.subr.bf16.mxu0 0
      %1171 = vmatpush1.bf16.msra.mxu0 %v1146
      %1172 = vmatprep.subr.bf16.mxu0 0
      %1173 = vmatpush1.bf16.msra.mxu0 %v1145
      %1174 = vmatprep.subr.bf16.mxu0 0
      %1175 = vmatpush1.bf16.msra.mxu0 %v1144
      %1176 = vmatprep.subr.bf16.mxu0 0
      %1177 = vmatpush2.bf16.msra.mxu0 0
      %1178 = vmatprep.subr.bf16.mxu0 0
      %1179 = vmatpush2.bf16.msra.mxu0 0
      %1180 = vmatprep.subr.bf16.mxu0 0
      %1181 = vmatpush2.bf16.msra.mxu0 0
      %1182 = vmatprep.subr.bf16.mxu0 0
      %1183 = vmatpush2.bf16.msra.mxu0 0
      %1184 = vmatprep.subr.bf16.mxu0 0
      %1185 = vmatpush2.bf16.msra.mxu0 0
      %1186 = vmatprep.subr.bf16.mxu0 0
      %1187 = vmatpush2.bf16.msra.mxu0 0
      %1188 = vmatprep.subr.bf16.mxu0 0
      %1189 = vmatpush2.bf16.msra.mxu0 0
      %1190 = vmatprep.subr.bf16.mxu0 0
      %1191 = vmatpush2.bf16.msra.mxu0 0
      %1192 = vmatprep.mubr.bf16.mxu0 0
      %1193 = vmatmul.mubr.bf16.gmra.mxu0 %v1075
      %v1194 = vpop.f32.mrf.mxu0
      %v1195 = vadd.f32 %v1111, %v1194
      %v1196 = vpop.f32.mrf.mxu0
      %v1197 = vpop.f32.mrf.mxu0
      %v1198 = vadd.f32 %v1111, %v1197
      %v1199 = vpop.f32.mrf.mxu0
      %1200 = vmatprep.mubr.bf16.mxu0 0
      %1201 = vmatmul.mubr.bf16.gmra.mxu0 %v1076
      %v1202 = vpop.f32.mrf.mxu0
      %v1203 = vadd.f32 %v1111, %v1202
      %v1204 = vpop.f32.mrf.mxu0
      %v1205 = vpop.f32.mrf.mxu0
      %v1206 = vadd.f32 %v1111, %v1205
      %v1207 = vpop.f32.mrf.mxu0
      %1208 = vmatprep.mubr.bf16.mxu0 0
      %1209 = vmatmul.mubr.bf16.gmra.mxu0 %v1077
      %v1210 = vpop.f32.mrf.mxu0
      %v1211 = vadd.f32 %v1111, %v1210
      %v1212 = vpop.f32.mrf.mxu0
      %v1213 = vpop.f32.mrf.mxu0
      %v1214 = vadd.f32 %v1111, %v1213
      %v1215 = vpop.f32.mrf.mxu0
      %1216 = vmatprep.mubr.bf16.mxu0 0
      %1217 = vmatmul.mubr.bf16.gmra.mxu0 %v1078
      %v1218 = vpop.f32.mrf.mxu0
      %v1219 = vadd.f32 %v1111, %v1218
      %v1220 = vpop.f32.mrf.mxu0
      %v1221 = vpop.f32.mrf.mxu0
      %v1222 = vadd.f32 %v1111, %v1221
      %v1223 = vpop.f32.mrf.mxu0
      %1224 = vmatprep.mubr.bf16.mxu0 0
      %1225 = vmatmul.mubr.bf16.gmra.mxu0 %v1079
      %v1226 = vpop.f32.mrf.mxu0
      %v1227 = vadd.f32 %v1111, %v1226
      %v1228 = vpop.f32.mrf.mxu0
      %v1229 = vpop.f32.mrf.mxu0
      %v1230 = vadd.f32 %v1111, %v1229
      %v1231 = vpop.f32.mrf.mxu0
      %1232 = vmatprep.mubr.bf16.mxu0 0
      %1233 = vmatmul.mubr.bf16.gmra.mxu0 %v1080
      %v1234 = vpop.f32.mrf.mxu0
      %v1235 = vadd.f32 %v1111, %v1234
      %v1236 = vpop.f32.mrf.mxu0
      %v1237 = vpop.f32.mrf.mxu0
      %v1238 = vadd.f32 %v1111, %v1237
      %v1239 = vpop.f32.mrf.mxu0
      %1240 = vmatprep.mubr.bf16.mxu0 0
      %1241 = vmatmul.mubr.bf16.gmra.mxu0 %v1081
      %v1242 = vpop.f32.mrf.mxu0
      %v1243 = vadd.f32 %v1111, %v1242
      %v1244 = vpop.f32.mrf.mxu0
      %v1245 = vpop.f32.mrf.mxu0
      %v1246 = vadd.f32 %v1111, %v1245
      %v1247 = vpop.f32.mrf.mxu0
      %1248 = vmatprep.mubr.bf16.mxu0 0
      %1249 = vmatmul.mubr.bf16.gmra.mxu0 %v1082
      %v1250 = vpop.f32.mrf.mxu0
      %v1251 = vadd.f32 %v1111, %v1250
      %v1252 = vpop.f32.mrf.mxu0
      %v1253 = vpop.f32.mrf.mxu0
      %v1254 = vadd.f32 %v1111, %v1253
      %v1255 = vpop.f32.mrf.mxu0
      %1256 = vmatprep.mubr.bf16.mxu0 0
      %1257 = vmatmul.mubr.bf16.gmra.mxu0 %v1083
      %v1258 = vpop.f32.mrf.mxu0
      %v1259 = vadd.f32 %v1111, %v1258
      %v1260 = vpop.f32.mrf.mxu0
      %v1261 = vpop.f32.mrf.mxu0
      %v1262 = vadd.f32 %v1111, %v1261
      %v1263 = vpop.f32.mrf.mxu0
      %1264 = vmatprep.mubr.bf16.mxu0 0
      %1265 = vmatmul.mubr.bf16.gmra.mxu0 %v1084
      %v1266 = vpop.f32.mrf.mxu0
      %v1267 = vadd.f32 %v1111, %v1266
      %v1268 = vpop.f32.mrf.mxu0
      %v1269 = vpop.f32.mrf.mxu0
      %v1270 = vadd.f32 %v1111, %v1269
      %v1271 = vpop.f32.mrf.mxu0
      %1272 = vmatprep.mubr.bf16.mxu0 0
      %1273 = vmatmul.mubr.bf16.gmra.mxu0 %v1085
      %v1274 = vpop.f32.mrf.mxu0
      %v1275 = vadd.f32 %v1111, %v1274
      %v1276 = vpop.f32.mrf.mxu0
      %v1277 = vpop.f32.mrf.mxu0
      %v1278 = vadd.f32 %v1111, %v1277
      %v1279 = vpop.f32.mrf.mxu0
      %1280 = vmatprep.mubr.bf16.mxu0 0
      %1281 = vmatmul.mubr.bf16.gmra.mxu0 %v1086
      %v1282 = vpop.f32.mrf.mxu0
      %v1283 = vadd.f32 %v1111, %v1282
      %v1284 = vpop.f32.mrf.mxu0
      %v1285 = vpop.f32.mrf.mxu0
      %v1286 = vadd.f32 %v1111, %v1285
      %v1287 = vpop.f32.mrf.mxu0
      %1288 = vmatprep.mubr.bf16.mxu0 0
      %1289 = vmatmul.mubr.bf16.gmra.mxu0 %v1087
      %v1290 = vpop.f32.mrf.mxu0
      %v1291 = vadd.f32 %v1111, %v1290
      %v1292 = vpop.f32.mrf.mxu0
      %v1293 = vpop.f32.mrf.mxu0
      %v1294 = vadd.f32 %v1111, %v1293
      %v1295 = vpop.f32.mrf.mxu0
      %1296 = vmatprep.mubr.bf16.mxu0 0
      %1297 = vmatmul.mubr.bf16.gmra.mxu0 %v1088
      %v1298 = vpop.f32.mrf.mxu0
      %v1299 = vadd.f32 %v1111, %v1298
      %v1300 = vpop.f32.mrf.mxu0
      %v1301 = vpop.f32.mrf.mxu0
      %v1302 = vadd.f32 %v1111, %v1301
      %v1303 = vpop.f32.mrf.mxu0
      %1304 = vmatprep.mubr.bf16.mxu0 0
      %1305 = vmatmul.mubr.bf16.gmra.mxu0 %v1089
      %v1306 = vpop.f32.mrf.mxu0
      %v1307 = vadd.f32 %v1111, %v1306
      %v1308 = vpop.f32.mrf.mxu0
      %v1309 = vpop.f32.mrf.mxu0
      %v1310 = vadd.f32 %v1111, %v1309
      %v1311 = vpop.f32.mrf.mxu0
      %1312 = vmatprep.mubr.bf16.mxu0 0
      %1313 = vmatmul.mubr.bf16.gmra.mxu0 %v1090
      %v1314 = vpop.f32.mrf.mxu0
      %v1315 = vadd.f32 %v1111, %v1314
      %v1316 = vpop.f32.mrf.mxu0
      %v1317 = vpop.f32.mrf.mxu0
      %v1318 = vadd.f32 %v1111, %v1317
      %v1319 = vpop.f32.mrf.mxu0
      %1320 = vdwg.mxu0
      %v1321 = vxor.u32 %v1195, 2147483648
      %v1322 = vxor.u32 %v1198, 2147483648
      %v1323 = vxor.u32 %v1203, 2147483648
      %v1324 = vxor.u32 %v1206, 2147483648
      %v1325 = vxor.u32 %v1211, 2147483648
      %v1326 = vxor.u32 %v1214, 2147483648
      %v1327 = vxor.u32 %v1219, 2147483648
      %v1328 = vxor.u32 %v1222, 2147483648
      %v1329 = vxor.u32 %v1227, 2147483648
      %v1330 = vxor.u32 %v1230, 2147483648
      %v1331 = vxor.u32 %v1235, 2147483648
      %v1332 = vxor.u32 %v1238, 2147483648
      %v1333 = vxor.u32 %v1243, 2147483648
      %v1334 = vxor.u32 %v1246, 2147483648
      %v1335 = vxor.u32 %v1251, 2147483648
      %v1336 = vxor.u32 %v1254, 2147483648
      %v1337 = vxor.u32 %v1259, 2147483648
      %v1338 = vxor.u32 %v1262, 2147483648
      %v1339 = vxor.u32 %v1267, 2147483648
      %v1340 = vxor.u32 %v1270, 2147483648
      %v1341 = vxor.u32 %v1275, 2147483648
      %v1342 = vxor.u32 %v1278, 2147483648
      %v1343 = vxor.u32 %v1283, 2147483648
      %v1344 = vxor.u32 %v1286, 2147483648
      %v1345 = vxor.u32 %v1291, 2147483648
      %v1346 = vxor.u32 %v1294, 2147483648
      %v1347 = vxor.u32 %v1299, 2147483648
      %v1348 = vxor.u32 %v1302, 2147483648
      %v1349 = vxor.u32 %v1307, 2147483648
      %v1350 = vxor.u32 %v1310, 2147483648
      %v1351 = vxor.u32 %v1315, 2147483648
      %v1352 = vxor.u32 %v1318, 2147483648
      %v1353 = vmul.f32 %v1321, 1.442695
      %v1354 = vpow.pop %v1353
      %v1355 = vmul.f32 %v1322, 1.442695
      %v1356 = vpow.pop %v1355
      %v1357 = vmul.f32 %v1323, 1.442695
      %v1358 = vpow.pop %v1357
      %v1359 = vmul.f32 %v1324, 1.442695
      %v1360 = vpow.pop %v1359
      %v1361 = vmul.f32 %v1325, 1.442695
      %v1362 = vpow.pop %v1361
      %v1363 = vmul.f32 %v1326, 1.442695
      %v1364 = vpow.pop %v1363
      %v1365 = vmul.f32 %v1327, 1.442695
      %v1366 = vpow.pop %v1365
      %v1367 = vmul.f32 %v1328, 1.442695
      %v1368 = vpow.pop %v1367
      %v1369 = vmul.f32 %v1329, 1.442695
      %v1370 = vpow.pop %v1369
      %v1371 = vmul.f32 %v1330, 1.442695
      %v1372 = vpow.pop %v1371
      %v1373 = vmul.f32 %v1331, 1.442695
      %v1374 = vpow.pop %v1373
      %v1375 = vmul.f32 %v1332, 1.442695
      %v1376 = vpow.pop %v1375
      %v1377 = vmul.f32 %v1333, 1.442695
      %v1378 = vpow.pop %v1377
      %v1379 = vmul.f32 %v1334, 1.442695
      %v1380 = vpow.pop %v1379
      %v1381 = vmul.f32 %v1335, 1.442695
      %v1382 = vpow.pop %v1381
      %v1383 = vmul.f32 %v1336, 1.442695
      %v1384 = vpow.pop %v1383
      %v1385 = vmul.f32 %v1337, 1.442695
      %v1386 = vpow.pop %v1385
      %v1387 = vmul.f32 %v1338, 1.442695
      %v1388 = vpow.pop %v1387
      %v1389 = vmul.f32 %v1339, 1.442695
      %v1390 = vpow.pop %v1389
      %v1391 = vmul.f32 %v1340, 1.442695
      %v1392 = vpow.pop %v1391
      %v1393 = vmul.f32 %v1341, 1.442695
      %v1394 = vpow.pop %v1393
      %v1395 = vmul.f32 %v1342, 1.442695
      %v1396 = vpow.pop %v1395
      %v1397 = vmul.f32 %v1343, 1.442695
      %v1398 = vpow.pop %v1397
      %v1399 = vmul.f32 %v1344, 1.442695
      %v1400 = vpow.pop %v1399
      %v1401 = vmul.f32 %v1345, 1.442695
      %v1402 = vpow.pop %v1401
      %v1403 = vmul.f32 %v1346, 1.442695
      %v1404 = vpow.pop %v1403
      %v1405 = vmul.f32 %v1347, 1.442695
      %v1406 = vpow.pop %v1405
      %v1407 = vmul.f32 %v1348, 1.442695
      %v1408 = vpow.pop %v1407
      %v1409 = vmul.f32 %v1349, 1.442695
      %v1410 = vpow.pop %v1409
      %v1411 = vmul.f32 %v1350, 1.442695
      %v1412 = vpow.pop %v1411
      %v1413 = vmul.f32 %v1351, 1.442695
      %v1414 = vpow.pop %v1413
      %v1415 = vmul.f32 %v1352, 1.442695
      %v1416 = vpow.pop %v1415
      %v1417 = vadd.f32 %v1354, 1.0
      %v1418 = vadd.f32 %v1356, 1.0
      %v1419 = vadd.f32 %v1358, 1.0
      %v1420 = vadd.f32 %v1360, 1.0
      %v1421 = vadd.f32 %v1362, 1.0
      %v1422 = vadd.f32 %v1364, 1.0
      %v1423 = vadd.f32 %v1366, 1.0
      %v1424 = vadd.f32 %v1368, 1.0
      %v1425 = vadd.f32 %v1370, 1.0
      %v1426 = vadd.f32 %v1372, 1.0
      %v1427 = vadd.f32 %v1374, 1.0
      %v1428 = vadd.f32 %v1376, 1.0
      %v1429 = vadd.f32 %v1378, 1.0
      %v1430 = vadd.f32 %v1380, 1.0
      %v1431 = vadd.f32 %v1382, 1.0
      %v1432 = vadd.f32 %v1384, 1.0
      %v1433 = vadd.f32 %v1386, 1.0
      %v1434 = vadd.f32 %v1388, 1.0
      %v1435 = vadd.f32 %v1390, 1.0
      %v1436 = vadd.f32 %v1392, 1.0
      %v1437 = vadd.f32 %v1394, 1.0
      %v1438 = vadd.f32 %v1396, 1.0
      %v1439 = vadd.f32 %v1398, 1.0
      %v1440 = vadd.f32 %v1400, 1.0
      %v1441 = vadd.f32 %v1402, 1.0
      %v1442 = vadd.f32 %v1404, 1.0
      %v1443 = vadd.f32 %v1406, 1.0
      %v1444 = vadd.f32 %v1408, 1.0
      %v1445 = vadd.f32 %v1410, 1.0
      %v1446 = vadd.f32 %v1412, 1.0
      %v1447 = vadd.f32 %v1414, 1.0
      %v1448 = vadd.f32 %v1416, 1.0
      %v1449 = vrcp.pop %v1417
      %v1450 = vmul.f32 1.0, %v1449
      %v1451 = vrcp.pop %v1418
      %v1452 = vmul.f32 1.0, %v1451
      %v1453 = vrcp.pop %v1419
      %v1454 = vmul.f32 1.0, %v1453
      %v1455 = vrcp.pop %v1420
      %v1456 = vmul.f32 1.0, %v1455
      %v1457 = vrcp.pop %v1421
      %v1458 = vmul.f32 1.0, %v1457
      %v1459 = vrcp.pop %v1422
      %v1460 = vmul.f32 1.0, %v1459
      %v1461 = vrcp.pop %v1423
      %v1462 = vmul.f32 1.0, %v1461
      %v1463 = vrcp.pop %v1424
      %v1464 = vmul.f32 1.0, %v1463
      %v1465 = vrcp.pop %v1425
      %v1466 = vmul.f32 1.0, %v1465
      %v1467 = vrcp.pop %v1426
      %v1468 = vmul.f32 1.0, %v1467
      %v1469 = vrcp.pop %v1427
      %v1470 = vmul.f32 1.0, %v1469
      %v1471 = vrcp.pop %v1428
      %v1472 = vmul.f32 1.0, %v1471
      %v1473 = vrcp.pop %v1429
      %v1474 = vmul.f32 1.0, %v1473
      %v1475 = vrcp.pop %v1430
      %v1476 = vmul.f32 1.0, %v1475
      %v1477 = vrcp.pop %v1431
      %v1478 = vmul.f32 1.0, %v1477
      %v1479 = vrcp.pop %v1432
      %v1480 = vmul.f32 1.0, %v1479
      %v1481 = vrcp.pop %v1433
      %v1482 = vmul.f32 1.0, %v1481
      %v1483 = vrcp.pop %v1434
      %v1484 = vmul.f32 1.0, %v1483
      %v1485 = vrcp.pop %v1435
      %v1486 = vmul.f32 1.0, %v1485
      %v1487 = vrcp.pop %v1436
      %v1488 = vmul.f32 1.0, %v1487
      %v1489 = vrcp.pop %v1437
      %v1490 = vmul.f32 1.0, %v1489
      %v1491 = vrcp.pop %v1438
      %v1492 = vmul.f32 1.0, %v1491
      %v1493 = vrcp.pop %v1439
      %v1494 = vmul.f32 1.0, %v1493
      %v1495 = vrcp.pop %v1440
      %v1496 = vmul.f32 1.0, %v1495
      %v1497 = vrcp.pop %v1441
      %v1498 = vmul.f32 1.0, %v1497
      %v1499 = vrcp.pop %v1442
      %v1500 = vmul.f32 1.0, %v1499
      %v1501 = vrcp.pop %v1443
      %v1502 = vmul.f32 1.0, %v1501
      %v1503 = vrcp.pop %v1444
      %v1504 = vmul.f32 1.0, %v1503
      %v1505 = vrcp.pop %v1445
      %v1506 = vmul.f32 1.0, %v1505
      %v1507 = vrcp.pop %v1446
      %v1508 = vmul.f32 1.0, %v1507
      %v1509 = vrcp.pop %v1447
      %v1510 = vmul.f32 1.0, %v1509
      %v1511 = vrcp.pop %v1448
      %v1512 = vmul.f32 1.0, %v1511
      %1513 = vst.msk [vmem:[%s207] sm:$0xff] %vm277, %v1450
      %1514 = vst.msk [vmem:[%s207 + $0x8] sm:$0xff] %vm277, %v1452
      %1515 = vst.msk [vmem:[%s207 + $0x10] sm:$0xff] %vm277, %v1454
      %1516 = vst.msk [vmem:[%s207 + $0x18] sm:$0xff] %vm277, %v1456
      %1517 = vst.msk [vmem:[%s207 + $0x20] sm:$0xff] %vm277, %v1458
      %1518 = vst.msk [vmem:[%s207 + $0x28] sm:$0xff] %vm277, %v1460
      %1519 = vst.msk [vmem:[%s207 + $0x30] sm:$0xff] %vm277, %v1462
      %1520 = vst.msk [vmem:[%s207 + $0x38] sm:$0xff] %vm277, %v1464
      %1521 = vst.msk [vmem:[%s207 + $0x40] sm:$0xff] %vm277, %v1466
      %1522 = vst.msk [vmem:[%s207 + $0x48] sm:$0xff] %vm277, %v1468
      %1523 = vst.msk [vmem:[%s207 + $0x50] sm:$0xff] %vm277, %v1470
      %1524 = vst.msk [vmem:[%s207 + $0x58] sm:$0xff] %vm277, %v1472
      %1525 = vst.msk [vmem:[%s207 + $0x60] sm:$0xff] %vm277, %v1474
      %1526 = vst.msk [vmem:[%s207 + $0x68] sm:$0xff] %vm277, %v1476
      %1527 = vst.msk [vmem:[%s207 + $0x70] sm:$0xff] %vm277, %v1478
      %1528 = vst.msk [vmem:[%s207 + $0x78] sm:$0xff] %vm277, %v1480
      %1529 = vst.msk [vmem:[%s207 + $0x80] sm:$0xff] %vm277, %v1482
      %1530 = vst.msk [vmem:[%s207 + $0x88] sm:$0xff] %vm277, %v1484
      %1531 = vst.msk [vmem:[%s207 + $0x90] sm:$0xff] %vm277, %v1486
      %1532 = vst.msk [vmem:[%s207 + $0x98] sm:$0xff] %vm277, %v1488
      %1533 = vst.msk [vmem:[%s207 + $0xa0] sm:$0xff] %vm277, %v1490
      %1534 = vst.msk [vmem:[%s207 + $0xa8] sm:$0xff] %vm277, %v1492
      %1535 = vst.msk [vmem:[%s207 + $0xb0] sm:$0xff] %vm277, %v1494
      %1536 = vst.msk [vmem:[%s207 + $0xb8] sm:$0xff] %vm277, %v1496
      %1537 = vst.msk [vmem:[%s207 + $0xc0] sm:$0xff] %vm277, %v1498
      %1538 = vst.msk [vmem:[%s207 + $0xc8] sm:$0xff] %vm277, %v1500
      %1539 = vst.msk [vmem:[%s207 + $0xd0] sm:$0xff] %vm277, %v1502
      %1540 = vst.msk [vmem:[%s207 + $0xd8] sm:$0xff] %vm277, %v1504
      %1541 = vst.msk [vmem:[%s207 + $0xe0] sm:$0xff] %vm277, %v1506
      %1542 = vst.msk [vmem:[%s207 + $0xe8] sm:$0xff] %vm277, %v1508
      %1543 = vst.msk [vmem:[%s207 + $0xf0] sm:$0xff] %vm277, %v1510
      %1544 = vst.msk [vmem:[%s207 + $0xf8] sm:$0xff] %vm277, %v1512
      %vm1545 = vcmp.gt.f32.partialorder %v1450, 0.5
      %vm1546 = vcmp.gt.f32.partialorder %v1452, 0.5
      %vm1547 = vcmp.gt.f32.partialorder %v1454, 0.5
      %vm1548 = vcmp.gt.f32.partialorder %v1456, 0.5
      %vm1549 = vcmp.gt.f32.partialorder %v1458, 0.5
      %vm1550 = vcmp.gt.f32.partialorder %v1460, 0.5
      %vm1551 = vcmp.gt.f32.partialorder %v1462, 0.5
      %vm1552 = vcmp.gt.f32.partialorder %v1464, 0.5
      %vm1553 = vcmp.gt.f32.partialorder %v1466, 0.5
      %vm1554 = vcmp.gt.f32.partialorder %v1468, 0.5
      %vm1555 = vcmp.gt.f32.partialorder %v1470, 0.5
      %vm1556 = vcmp.gt.f32.partialorder %v1472, 0.5
      %vm1557 = vcmp.gt.f32.partialorder %v1474, 0.5
      %vm1558 = vcmp.gt.f32.partialorder %v1476, 0.5
      %vm1559 = vcmp.gt.f32.partialorder %v1478, 0.5
      %vm1560 = vcmp.gt.f32.partialorder %v1480, 0.5
      %vm1561 = vcmp.gt.f32.partialorder %v1482, 0.5
      %vm1562 = vcmp.gt.f32.partialorder %v1484, 0.5
      %vm1563 = vcmp.gt.f32.partialorder %v1486, 0.5
      %vm1564 = vcmp.gt.f32.partialorder %v1488, 0.5
      %vm1565 = vcmp.gt.f32.partialorder %v1490, 0.5
      %vm1566 = vcmp.gt.f32.partialorder %v1492, 0.5
      %vm1567 = vcmp.gt.f32.partialorder %v1494, 0.5
      %vm1568 = vcmp.gt.f32.partialorder %v1496, 0.5
      %vm1569 = vcmp.gt.f32.partialorder %v1498, 0.5
      %vm1570 = vcmp.gt.f32.partialorder %v1500, 0.5
      %vm1571 = vcmp.gt.f32.partialorder %v1502, 0.5
      %vm1572 = vcmp.gt.f32.partialorder %v1504, 0.5
      %vm1573 = vcmp.gt.f32.partialorder %v1506, 0.5
      %vm1574 = vcmp.gt.f32.partialorder %v1508, 0.5
      %vm1575 = vcmp.gt.f32.partialorder %v1510, 0.5
      %vm1576 = vcmp.gt.f32.partialorder %v1512, 0.5
      %v1577 = vsel %vm1545, 1, 0
      %v1578 = vsel %vm1546, 1, 0
      %v1579 = vsel %vm1547, 1, 0
      %v1580 = vsel %vm1548, 1, 0
      %v1581 = vsel %vm1549, 1, 0
      %v1582 = vsel %vm1550, 1, 0
      %v1583 = vsel %vm1551, 1, 0
      %v1584 = vsel %vm1552, 1, 0
      %v1585 = vsel %vm1553, 1, 0
      %v1586 = vsel %vm1554, 1, 0
      %v1587 = vsel %vm1555, 1, 0
      %v1588 = vsel %vm1556, 1, 0
      %v1589 = vsel %vm1557, 1, 0
      %v1590 = vsel %vm1558, 1, 0
      %v1591 = vsel %vm1559, 1, 0
      %v1592 = vsel %vm1560, 1, 0
      %v1593 = vsel %vm1561, 1, 0
      %v1594 = vsel %vm1562, 1, 0
      %v1595 = vsel %vm1563, 1, 0
      %v1596 = vsel %vm1564, 1, 0
      %v1597 = vsel %vm1565, 1, 0
      %v1598 = vsel %vm1566, 1, 0
      %v1599 = vsel %vm1567, 1, 0
      %v1600 = vsel %vm1568, 1, 0
      %v1601 = vsel %vm1569, 1, 0
      %v1602 = vsel %vm1570, 1, 0
      %v1603 = vsel %vm1571, 1, 0
      %v1604 = vsel %vm1572, 1, 0
      %v1605 = vsel %vm1573, 1, 0
      %v1606 = vsel %vm1574, 1, 0
      %v1607 = vsel %vm1575, 1, 0
      %v1608 = vsel %vm1576, 1, 0
      %v1609 = vcvt.s32.f32 %v1577
      %v1610 = vcvt.s32.f32 %v1578
      %v1611 = vcvt.s32.f32 %v1579
      %v1612 = vcvt.s32.f32 %v1580
      %v1613 = vcvt.s32.f32 %v1581
      %v1614 = vcvt.s32.f32 %v1582
      %v1615 = vcvt.s32.f32 %v1583
      %v1616 = vcvt.s32.f32 %v1584
      %v1617 = vcvt.s32.f32 %v1585
      %v1618 = vcvt.s32.f32 %v1586
      %v1619 = vcvt.s32.f32 %v1587
      %v1620 = vcvt.s32.f32 %v1588
      %v1621 = vcvt.s32.f32 %v1589
      %v1622 = vcvt.s32.f32 %v1590
      %v1623 = vcvt.s32.f32 %v1591
      %v1624 = vcvt.s32.f32 %v1592
      %v1625 = vcvt.s32.f32 %v1593
      %v1626 = vcvt.s32.f32 %v1594
      %v1627 = vcvt.s32.f32 %v1595
      %v1628 = vcvt.s32.f32 %v1596
      %v1629 = vcvt.s32.f32 %v1597
      %v1630 = vcvt.s32.f32 %v1598
      %v1631 = vcvt.s32.f32 %v1599
      %v1632 = vcvt.s32.f32 %v1600
      %v1633 = vcvt.s32.f32 %v1601
      %v1634 = vcvt.s32.f32 %v1602
      %v1635 = vcvt.s32.f32 %v1603
      %v1636 = vcvt.s32.f32 %v1604
      %v1637 = vcvt.s32.f32 %v1605
      %v1638 = vcvt.s32.f32 %v1606
      %v1639 = vcvt.s32.f32 %v1607
      %v1640 = vcvt.s32.f32 %v1608
      %v1641 = vpack.c.bf16 %v1610, %v1609
      %v1642 = vpack.c.bf16 %v1612, %v1611
      %v1643 = vpack.c.bf16 %v1614, %v1613
      %v1644 = vpack.c.bf16 %v1616, %v1615
      %v1645 = vpack.c.bf16 %v1618, %v1617
      %v1646 = vpack.c.bf16 %v1620, %v1619
      %v1647 = vpack.c.bf16 %v1622, %v1621
      %v1648 = vpack.c.bf16 %v1624, %v1623
      %v1649 = vpack.c.bf16 %v1626, %v1625
      %v1650 = vpack.c.bf16 %v1628, %v1627
      %v1651 = vpack.c.bf16 %v1630, %v1629
      %v1652 = vpack.c.bf16 %v1632, %v1631
      %v1653 = vpack.c.bf16 %v1634, %v1633
      %v1654 = vpack.c.bf16 %v1636, %v1635
      %v1655 = vpack.c.bf16 %v1638, %v1637
      %v1656 = vpack.c.bf16 %v1640, %v1639
      %s1657 = scalar_lea.vmem %s0, 256
      %v1658 = vld [vmem:[%s1657] sm:$0xf]
      %v1659 = vld [vmem:[%s1657 + $0x4] sm:$0xf]
      %v1660 = vld [vmem:[%s1657 + $0x8] sm:$0xf]
      %v1661 = vld [vmem:[%s1657 + $0xc] sm:$0xf]
      %v1662 = vld [vmem:[%s1657 + $0x10] sm:$0xf]
      %v1663 = vld [vmem:[%s1657 + $0x14] sm:$0xf]
      %v1664 = vld [vmem:[%s1657 + $0x18] sm:$0xf]
      %v1665 = vld [vmem:[%s1657 + $0x1c] sm:$0xf]
      %v1666 = vld [vmem:[%s1657 + $0x20] sm:$0xf]
      %v1667 = vld [vmem:[%s1657 + $0x24] sm:$0xf]
      %v1668 = vld [vmem:[%s1657 + $0x28] sm:$0xf]
      %v1669 = vld [vmem:[%s1657 + $0x2c] sm:$0xf]
      %v1670 = vld [vmem:[%s1657 + $0x30] sm:$0xf]
      %v1671 = vld [vmem:[%s1657 + $0x34] sm:$0xf]
      %v1672 = vld [vmem:[%s1657 + $0x38] sm:$0xf]
      %v1673 = vld [vmem:[%s1657 + $0x3c] sm:$0xf]
      %v1674 = vlaneseq
      %v1675 = vshrl.u32 %v1674, 7
      %v1676 = vsub.s32 4, %v1675
      %v1677 = vrot.slane %v216, %v1676
      %v1694 = vunpack.c.l.b16 %v1658
      %v1695 = vunpack.c.l.b16 %v1659
      %v1696 = vunpack.c.l.b16 %v1660
      %v1697 = vunpack.c.l.b16 %v1661
      %v1698 = vunpack.c.l.b16 %v1662
      %v1699 = vunpack.c.l.b16 %v1663
      %v1700 = vunpack.c.l.b16 %v1664
      %v1701 = vunpack.c.l.b16 %v1665
      %v1702 = vunpack.c.l.b16 %v1666
      %v1703 = vunpack.c.l.b16 %v1667
      %v1704 = vunpack.c.l.b16 %v1668
      %v1705 = vunpack.c.l.b16 %v1669
      %v1706 = vunpack.c.l.b16 %v1670
      %v1707 = vunpack.c.l.b16 %v1671
      %v1708 = vunpack.c.l.b16 %v1672
      %v1709 = vunpack.c.l.b16 %v1673
      %v1710 = vpack.c.b16 %v1695, %v1694
      %v1711 = vpack.c.b16 %v1697, %v1696
      %v1712 = vpack.c.b16 %v1699, %v1698
      %v1713 = vpack.c.b16 %v1701, %v1700
      %v1714 = vpack.c.b16 %v1703, %v1702
      %v1715 = vpack.c.b16 %v1705, %v1704
      %v1716 = vpack.c.b16 %v1707, %v1706
      %v1717 = vpack.c.b16 %v1709, %v1708
      %1726 = vmatprep.subr.bf16.mxu0 0
      %1727 = vmatpush1.bf16.msra.mxu0 %v1717
      %1728 = vmatprep.subr.bf16.mxu0 0
      %1729 = vmatpush1.bf16.msra.mxu0 %v1716
      %1730 = vmatprep.subr.bf16.mxu0 0
      %1731 = vmatpush1.bf16.msra.mxu0 %v1715
      %1732 = vmatprep.subr.bf16.mxu0 0
      %1733 = vmatpush1.bf16.msra.mxu0 %v1714
      %1734 = vmatprep.subr.bf16.mxu0 0
      %1735 = vmatpush1.bf16.msra.mxu0 %v1713
      %1736 = vmatprep.subr.bf16.mxu0 0
      %1737 = vmatpush1.bf16.msra.mxu0 %v1712
      %1738 = vmatprep.subr.bf16.mxu0 0
      %1739 = vmatpush1.bf16.msra.mxu0 %v1711
      %1740 = vmatprep.subr.bf16.mxu0 0
      %1741 = vmatpush1.bf16.msra.mxu0 %v1710
      %1742 = vmatprep.subr.bf16.mxu0 0
      %1743 = vmatpush2.bf16.msra.mxu0 0
      %1744 = vmatprep.subr.bf16.mxu0 0
      %1745 = vmatpush2.bf16.msra.mxu0 0
      %1746 = vmatprep.subr.bf16.mxu0 0
      %1747 = vmatpush2.bf16.msra.mxu0 0
      %1748 = vmatprep.subr.bf16.mxu0 0
      %1749 = vmatpush2.bf16.msra.mxu0 0
      %1750 = vmatprep.subr.bf16.mxu0 0
      %1751 = vmatpush2.bf16.msra.mxu0 0
      %1752 = vmatprep.subr.bf16.mxu0 0
      %1753 = vmatpush2.bf16.msra.mxu0 0
      %1754 = vmatprep.subr.bf16.mxu0 0
      %1755 = vmatpush2.bf16.msra.mxu0 0
      %1756 = vmatprep.subr.bf16.mxu0 0
      %1757 = vmatpush2.bf16.msra.mxu0 0
      %1758 = vmatprep.mubr.bf16.mxu0 0
      %1759 = vmatmul.mubr.bf16.gmra.mxu0 %v1641
      %v1760 = vpop.f32.mrf.mxu0
      %v1761 = vadd.f32 %v1677, %v1760
      %v1762 = vpop.f32.mrf.mxu0
      %v1763 = vpop.f32.mrf.mxu0
      %v1764 = vadd.f32 %v1677, %v1763
      %v1765 = vpop.f32.mrf.mxu0
      %1766 = vmatprep.mubr.bf16.mxu0 0
      %1767 = vmatmul.mubr.bf16.gmra.mxu0 %v1642
      %v1768 = vpop.f32.mrf.mxu0
      %v1769 = vadd.f32 %v1677, %v1768
      %v1770 = vpop.f32.mrf.mxu0
      %v1771 = vpop.f32.mrf.mxu0
      %v1772 = vadd.f32 %v1677, %v1771
      %v1773 = vpop.f32.mrf.mxu0
      %1774 = vmatprep.mubr.bf16.mxu0 0
      %1775 = vmatmul.mubr.bf16.gmra.mxu0 %v1643
      %v1776 = vpop.f32.mrf.mxu0
      %v1777 = vadd.f32 %v1677, %v1776
      %v1778 = vpop.f32.mrf.mxu0
      %v1779 = vpop.f32.mrf.mxu0
      %v1780 = vadd.f32 %v1677, %v1779
      %v1781 = vpop.f32.mrf.mxu0
      %1782 = vmatprep.mubr.bf16.mxu0 0
      %1783 = vmatmul.mubr.bf16.gmra.mxu0 %v1644
      %v1784 = vpop.f32.mrf.mxu0
      %v1785 = vadd.f32 %v1677, %v1784
      %v1786 = vpop.f32.mrf.mxu0
      %v1787 = vpop.f32.mrf.mxu0
      %v1788 = vadd.f32 %v1677, %v1787
      %v1789 = vpop.f32.mrf.mxu0
      %1790 = vmatprep.mubr.bf16.mxu0 0
      %1791 = vmatmul.mubr.bf16.gmra.mxu0 %v1645
      %v1792 = vpop.f32.mrf.mxu0
      %v1793 = vadd.f32 %v1677, %v1792
      %v1794 = vpop.f32.mrf.mxu0
      %v1795 = vpop.f32.mrf.mxu0
      %v1796 = vadd.f32 %v1677, %v1795
      %v1797 = vpop.f32.mrf.mxu0
      %1798 = vmatprep.mubr.bf16.mxu0 0
      %1799 = vmatmul.mubr.bf16.gmra.mxu0 %v1646
      %v1800 = vpop.f32.mrf.mxu0
      %v1801 = vadd.f32 %v1677, %v1800
      %v1802 = vpop.f32.mrf.mxu0
      %v1803 = vpop.f32.mrf.mxu0
      %v1804 = vadd.f32 %v1677, %v1803
      %v1805 = vpop.f32.mrf.mxu0
      %1806 = vmatprep.mubr.bf16.mxu0 0
      %1807 = vmatmul.mubr.bf16.gmra.mxu0 %v1647
      %v1808 = vpop.f32.mrf.mxu0
      %v1809 = vadd.f32 %v1677, %v1808
      %v1810 = vpop.f32.mrf.mxu0
      %v1811 = vpop.f32.mrf.mxu0
      %v1812 = vadd.f32 %v1677, %v1811
      %v1813 = vpop.f32.mrf.mxu0
      %1814 = vmatprep.mubr.bf16.mxu0 0
      %1815 = vmatmul.mubr.bf16.gmra.mxu0 %v1648
      %v1816 = vpop.f32.mrf.mxu0
      %v1817 = vadd.f32 %v1677, %v1816
      %v1818 = vpop.f32.mrf.mxu0
      %v1819 = vpop.f32.mrf.mxu0
      %v1820 = vadd.f32 %v1677, %v1819
      %v1821 = vpop.f32.mrf.mxu0
      %1822 = vmatprep.mubr.bf16.mxu0 0
      %1823 = vmatmul.mubr.bf16.gmra.mxu0 %v1649
      %v1824 = vpop.f32.mrf.mxu0
      %v1825 = vadd.f32 %v1677, %v1824
      %v1826 = vpop.f32.mrf.mxu0
      %v1827 = vpop.f32.mrf.mxu0
      %v1828 = vadd.f32 %v1677, %v1827
      %v1829 = vpop.f32.mrf.mxu0
      %1830 = vmatprep.mubr.bf16.mxu0 0
      %1831 = vmatmul.mubr.bf16.gmra.mxu0 %v1650
      %v1832 = vpop.f32.mrf.mxu0
      %v1833 = vadd.f32 %v1677, %v1832
      %v1834 = vpop.f32.mrf.mxu0
      %v1835 = vpop.f32.mrf.mxu0
      %v1836 = vadd.f32 %v1677, %v1835
      %v1837 = vpop.f32.mrf.mxu0
      %1838 = vmatprep.mubr.bf16.mxu0 0
      %1839 = vmatmul.mubr.bf16.gmra.mxu0 %v1651
      %v1840 = vpop.f32.mrf.mxu0
      %v1841 = vadd.f32 %v1677, %v1840
      %v1842 = vpop.f32.mrf.mxu0
      %v1843 = vpop.f32.mrf.mxu0
      %v1844 = vadd.f32 %v1677, %v1843
      %v1845 = vpop.f32.mrf.mxu0
      %1846 = vmatprep.mubr.bf16.mxu0 0
      %1847 = vmatmul.mubr.bf16.gmra.mxu0 %v1652
      %v1848 = vpop.f32.mrf.mxu0
      %v1849 = vadd.f32 %v1677, %v1848
      %v1850 = vpop.f32.mrf.mxu0
      %v1851 = vpop.f32.mrf.mxu0
      %v1852 = vadd.f32 %v1677, %v1851
      %v1853 = vpop.f32.mrf.mxu0
      %1854 = vmatprep.mubr.bf16.mxu0 0
      %1855 = vmatmul.mubr.bf16.gmra.mxu0 %v1653
      %v1856 = vpop.f32.mrf.mxu0
      %v1857 = vadd.f32 %v1677, %v1856
      %v1858 = vpop.f32.mrf.mxu0
      %v1859 = vpop.f32.mrf.mxu0
      %v1860 = vadd.f32 %v1677, %v1859
      %v1861 = vpop.f32.mrf.mxu0
      %1862 = vmatprep.mubr.bf16.mxu0 0
      %1863 = vmatmul.mubr.bf16.gmra.mxu0 %v1654
      %v1864 = vpop.f32.mrf.mxu0
      %v1865 = vadd.f32 %v1677, %v1864
      %v1866 = vpop.f32.mrf.mxu0
      %v1867 = vpop.f32.mrf.mxu0
      %v1868 = vadd.f32 %v1677, %v1867
      %v1869 = vpop.f32.mrf.mxu0
      %1870 = vmatprep.mubr.bf16.mxu0 0
      %1871 = vmatmul.mubr.bf16.gmra.mxu0 %v1655
      %v1872 = vpop.f32.mrf.mxu0
      %v1873 = vadd.f32 %v1677, %v1872
      %v1874 = vpop.f32.mrf.mxu0
      %v1875 = vpop.f32.mrf.mxu0
      %v1876 = vadd.f32 %v1677, %v1875
      %v1877 = vpop.f32.mrf.mxu0
      %1878 = vmatprep.mubr.bf16.mxu0 0
      %1879 = vmatmul.mubr.bf16.gmra.mxu0 %v1656
      %v1880 = vpop.f32.mrf.mxu0
      %v1881 = vadd.f32 %v1677, %v1880
      %v1882 = vpop.f32.mrf.mxu0
      %v1883 = vpop.f32.mrf.mxu0
      %v1884 = vadd.f32 %v1677, %v1883
      %v1885 = vpop.f32.mrf.mxu0
      %1886 = vdwg.mxu0
      %v1887 = vmax.f32 %v1761, 0.0
      %v1888 = vmax.f32 %v1764, 0.0
      %v1889 = vmax.f32 %v1769, 0.0
      %v1890 = vmax.f32 %v1772, 0.0
      %v1891 = vmax.f32 %v1777, 0.0
      %v1892 = vmax.f32 %v1780, 0.0
      %v1893 = vmax.f32 %v1785, 0.0
      %v1894 = vmax.f32 %v1788, 0.0
      %v1895 = vmax.f32 %v1793, 0.0
      %v1896 = vmax.f32 %v1796, 0.0
      %v1897 = vmax.f32 %v1801, 0.0
      %v1898 = vmax.f32 %v1804, 0.0
      %v1899 = vmax.f32 %v1809, 0.0
      %v1900 = vmax.f32 %v1812, 0.0
      %v1901 = vmax.f32 %v1817, 0.0
      %v1902 = vmax.f32 %v1820, 0.0
      %v1903 = vmax.f32 %v1825, 0.0
      %v1904 = vmax.f32 %v1828, 0.0
      %v1905 = vmax.f32 %v1833, 0.0
      %v1906 = vmax.f32 %v1836, 0.0
      %v1907 = vmax.f32 %v1841, 0.0
      %v1908 = vmax.f32 %v1844, 0.0
      %v1909 = vmax.f32 %v1849, 0.0
      %v1910 = vmax.f32 %v1852, 0.0
      %v1911 = vmax.f32 %v1857, 0.0
      %v1912 = vmax.f32 %v1860, 0.0
      %v1913 = vmax.f32 %v1865, 0.0
      %v1914 = vmax.f32 %v1868, 0.0
      %v1915 = vmax.f32 %v1873, 0.0
      %v1916 = vmax.f32 %v1876, 0.0
      %v1917 = vmax.f32 %v1881, 0.0
      %v1918 = vmax.f32 %v1884, 0.0
      %v1919 = vpack.c.bf16 %v1888, %v1887
      %v1920 = vpack.c.bf16 %v1890, %v1889
      %v1921 = vpack.c.bf16 %v1892, %v1891
      %v1922 = vpack.c.bf16 %v1894, %v1893
      %v1923 = vpack.c.bf16 %v1896, %v1895
      %v1924 = vpack.c.bf16 %v1898, %v1897
      %v1925 = vpack.c.bf16 %v1900, %v1899
      %v1926 = vpack.c.bf16 %v1902, %v1901
      %v1927 = vpack.c.bf16 %v1904, %v1903
      %v1928 = vpack.c.bf16 %v1906, %v1905
      %v1929 = vpack.c.bf16 %v1908, %v1907
      %v1930 = vpack.c.bf16 %v1910, %v1909
      %v1931 = vpack.c.bf16 %v1912, %v1911
      %v1932 = vpack.c.bf16 %v1914, %v1913
      %v1933 = vpack.c.bf16 %v1916, %v1915
      %v1934 = vpack.c.bf16 %v1918, %v1917
      %s1935 = scalar_lea.vmem %s0, 320
      %v1936 = vld [vmem:[%s1935] sm:$0xf]
      %v1937 = vld [vmem:[%s1935 + $0x4] sm:$0xf]
      %v1938 = vld [vmem:[%s1935 + $0x8] sm:$0xf]
      %v1939 = vld [vmem:[%s1935 + $0xc] sm:$0xf]
      %v1940 = vld [vmem:[%s1935 + $0x10] sm:$0xf]
      %v1941 = vld [vmem:[%s1935 + $0x14] sm:$0xf]
      %v1942 = vld [vmem:[%s1935 + $0x18] sm:$0xf]
      %v1943 = vld [vmem:[%s1935 + $0x1c] sm:$0xf]
      %v1944 = vld [vmem:[%s1935 + $0x20] sm:$0xf]
      %v1945 = vld [vmem:[%s1935 + $0x24] sm:$0xf]
      %v1946 = vld [vmem:[%s1935 + $0x28] sm:$0xf]
      %v1947 = vld [vmem:[%s1935 + $0x2c] sm:$0xf]
      %v1948 = vld [vmem:[%s1935 + $0x30] sm:$0xf]
      %v1949 = vld [vmem:[%s1935 + $0x34] sm:$0xf]
      %v1950 = vld [vmem:[%s1935 + $0x38] sm:$0xf]
      %v1951 = vld [vmem:[%s1935 + $0x3c] sm:$0xf]
      %v1952 = vlaneseq
      %v1953 = vshrl.u32 %v1952, 7
      %v1954 = vsub.s32 5, %v1953
      %v1955 = vrot.slane %v216, %v1954
      %v1972 = vunpack.c.l.b16 %v1936
      %v1973 = vunpack.c.l.b16 %v1937
      %v1974 = vunpack.c.l.b16 %v1938
      %v1975 = vunpack.c.l.b16 %v1939
      %v1976 = vunpack.c.l.b16 %v1940
      %v1977 = vunpack.c.l.b16 %v1941
      %v1978 = vunpack.c.l.b16 %v1942
      %v1979 = vunpack.c.l.b16 %v1943
      %v1980 = vunpack.c.l.b16 %v1944
      %v1981 = vunpack.c.l.b16 %v1945
      %v1982 = vunpack.c.l.b16 %v1946
      %v1983 = vunpack.c.l.b16 %v1947
      %v1984 = vunpack.c.l.b16 %v1948
      %v1985 = vunpack.c.l.b16 %v1949
      %v1986 = vunpack.c.l.b16 %v1950
      %v1987 = vunpack.c.l.b16 %v1951
      %v1988 = vpack.c.b16 %v1973, %v1972
      %v1989 = vpack.c.b16 %v1975, %v1974
      %v1990 = vpack.c.b16 %v1977, %v1976
      %v1991 = vpack.c.b16 %v1979, %v1978
      %v1992 = vpack.c.b16 %v1981, %v1980
      %v1993 = vpack.c.b16 %v1983, %v1982
      %v1994 = vpack.c.b16 %v1985, %v1984
      %v1995 = vpack.c.b16 %v1987, %v1986
      %2004 = vmatprep.subr.bf16.mxu0 0
      %2005 = vmatpush1.bf16.msra.mxu0 %v1995
      %2006 = vmatprep.subr.bf16.mxu0 0
      %2007 = vmatpush1.bf16.msra.mxu0 %v1994
      %2008 = vmatprep.subr.bf16.mxu0 0
      %2009 = vmatpush1.bf16.msra.mxu0 %v1993
      %2010 = vmatprep.subr.bf16.mxu0 0
      %2011 = vmatpush1.bf16.msra.mxu0 %v1992
      %2012 = vmatprep.subr.bf16.mxu0 0
      %2013 = vmatpush1.bf16.msra.mxu0 %v1991
      %2014 = vmatprep.subr.bf16.mxu0 0
      %2015 = vmatpush1.bf16.msra.mxu0 %v1990
      %2016 = vmatprep.subr.bf16.mxu0 0
      %2017 = vmatpush1.bf16.msra.mxu0 %v1989
      %2018 = vmatprep.subr.bf16.mxu0 0
      %2019 = vmatpush1.bf16.msra.mxu0 %v1988
      %2020 = vmatprep.subr.bf16.mxu0 0
      %2021 = vmatpush2.bf16.msra.mxu0 0
      %2022 = vmatprep.subr.bf16.mxu0 0
      %2023 = vmatpush2.bf16.msra.mxu0 0
      %2024 = vmatprep.subr.bf16.mxu0 0
      %2025 = vmatpush2.bf16.msra.mxu0 0
      %2026 = vmatprep.subr.bf16.mxu0 0
      %2027 = vmatpush2.bf16.msra.mxu0 0
      %2028 = vmatprep.subr.bf16.mxu0 0
      %2029 = vmatpush2.bf16.msra.mxu0 0
      %2030 = vmatprep.subr.bf16.mxu0 0
      %2031 = vmatpush2.bf16.msra.mxu0 0
      %2032 = vmatprep.subr.bf16.mxu0 0
      %2033 = vmatpush2.bf16.msra.mxu0 0
      %2034 = vmatprep.subr.bf16.mxu0 0
      %2035 = vmatpush2.bf16.msra.mxu0 0
      %2036 = vmatprep.mubr.bf16.mxu0 0
      %2037 = vmatmul.mubr.bf16.gmra.mxu0 %v1919
      %v2038 = vpop.f32.mrf.mxu0
      %v2039 = vadd.f32 %v1955, %v2038
      %v2040 = vpop.f32.mrf.mxu0
      %v2041 = vpop.f32.mrf.mxu0
      %v2042 = vadd.f32 %v1955, %v2041
      %v2043 = vpop.f32.mrf.mxu0
      %2044 = vmatprep.mubr.bf16.mxu0 0
      %2045 = vmatmul.mubr.bf16.gmra.mxu0 %v1920
      %v2046 = vpop.f32.mrf.mxu0
      %v2047 = vadd.f32 %v1955, %v2046
      %v2048 = vpop.f32.mrf.mxu0
      %v2049 = vpop.f32.mrf.mxu0
      %v2050 = vadd.f32 %v1955, %v2049
      %v2051 = vpop.f32.mrf.mxu0
      %2052 = vmatprep.mubr.bf16.mxu0 0
      %2053 = vmatmul.mubr.bf16.gmra.mxu0 %v1921
      %v2054 = vpop.f32.mrf.mxu0
      %v2055 = vadd.f32 %v1955, %v2054
      %v2056 = vpop.f32.mrf.mxu0
      %v2057 = vpop.f32.mrf.mxu0
      %v2058 = vadd.f32 %v1955, %v2057
      %v2059 = vpop.f32.mrf.mxu0
      %2060 = vmatprep.mubr.bf16.mxu0 0
      %2061 = vmatmul.mubr.bf16.gmra.mxu0 %v1922
      %v2062 = vpop.f32.mrf.mxu0
      %v2063 = vadd.f32 %v1955, %v2062
      %v2064 = vpop.f32.mrf.mxu0
      %v2065 = vpop.f32.mrf.mxu0
      %v2066 = vadd.f32 %v1955, %v2065
      %v2067 = vpop.f32.mrf.mxu0
      %2068 = vmatprep.mubr.bf16.mxu0 0
      %2069 = vmatmul.mubr.bf16.gmra.mxu0 %v1923
      %v2070 = vpop.f32.mrf.mxu0
      %v2071 = vadd.f32 %v1955, %v2070
      %v2072 = vpop.f32.mrf.mxu0
      %v2073 = vpop.f32.mrf.mxu0
      %v2074 = vadd.f32 %v1955, %v2073
      %v2075 = vpop.f32.mrf.mxu0
      %2076 = vmatprep.mubr.bf16.mxu0 0
      %2077 = vmatmul.mubr.bf16.gmra.mxu0 %v1924
      %v2078 = vpop.f32.mrf.mxu0
      %v2079 = vadd.f32 %v1955, %v2078
      %v2080 = vpop.f32.mrf.mxu0
      %v2081 = vpop.f32.mrf.mxu0
      %v2082 = vadd.f32 %v1955, %v2081
      %v2083 = vpop.f32.mrf.mxu0
      %2084 = vmatprep.mubr.bf16.mxu0 0
      %2085 = vmatmul.mubr.bf16.gmra.mxu0 %v1925
      %v2086 = vpop.f32.mrf.mxu0
      %v2087 = vadd.f32 %v1955, %v2086
      %v2088 = vpop.f32.mrf.mxu0
      %v2089 = vpop.f32.mrf.mxu0
      %v2090 = vadd.f32 %v1955, %v2089
      %v2091 = vpop.f32.mrf.mxu0
      %2092 = vmatprep.mubr.bf16.mxu0 0
      %2093 = vmatmul.mubr.bf16.gmra.mxu0 %v1926
      %v2094 = vpop.f32.mrf.mxu0
      %v2095 = vadd.f32 %v1955, %v2094
      %v2096 = vpop.f32.mrf.mxu0
      %v2097 = vpop.f32.mrf.mxu0
      %v2098 = vadd.f32 %v1955, %v2097
      %v2099 = vpop.f32.mrf.mxu0
      %2100 = vmatprep.mubr.bf16.mxu0 0
      %2101 = vmatmul.mubr.bf16.gmra.mxu0 %v1927
      %v2102 = vpop.f32.mrf.mxu0
      %v2103 = vadd.f32 %v1955, %v2102
      %v2104 = vpop.f32.mrf.mxu0
      %v2105 = vpop.f32.mrf.mxu0
      %v2106 = vadd.f32 %v1955, %v2105
      %v2107 = vpop.f32.mrf.mxu0
      %2108 = vmatprep.mubr.bf16.mxu0 0
      %2109 = vmatmul.mubr.bf16.gmra.mxu0 %v1928
      %v2110 = vpop.f32.mrf.mxu0
      %v2111 = vadd.f32 %v1955, %v2110
      %v2112 = vpop.f32.mrf.mxu0
      %v2113 = vpop.f32.mrf.mxu0
      %v2114 = vadd.f32 %v1955, %v2113
      %v2115 = vpop.f32.mrf.mxu0
      %2116 = vmatprep.mubr.bf16.mxu0 0
      %2117 = vmatmul.mubr.bf16.gmra.mxu0 %v1929
      %v2118 = vpop.f32.mrf.mxu0
      %v2119 = vadd.f32 %v1955, %v2118
      %v2120 = vpop.f32.mrf.mxu0
      %v2121 = vpop.f32.mrf.mxu0
      %v2122 = vadd.f32 %v1955, %v2121
      %v2123 = vpop.f32.mrf.mxu0
      %2124 = vmatprep.mubr.bf16.mxu0 0
      %2125 = vmatmul.mubr.bf16.gmra.mxu0 %v1930
      %v2126 = vpop.f32.mrf.mxu0
      %v2127 = vadd.f32 %v1955, %v2126
      %v2128 = vpop.f32.mrf.mxu0
      %v2129 = vpop.f32.mrf.mxu0
      %v2130 = vadd.f32 %v1955, %v2129
      %v2131 = vpop.f32.mrf.mxu0
      %2132 = vmatprep.mubr.bf16.mxu0 0
      %2133 = vmatmul.mubr.bf16.gmra.mxu0 %v1931
      %v2134 = vpop.f32.mrf.mxu0
      %v2135 = vadd.f32 %v1955, %v2134
      %v2136 = vpop.f32.mrf.mxu0
      %v2137 = vpop.f32.mrf.mxu0
      %v2138 = vadd.f32 %v1955, %v2137
      %v2139 = vpop.f32.mrf.mxu0
      %2140 = vmatprep.mubr.bf16.mxu0 0
      %2141 = vmatmul.mubr.bf16.gmra.mxu0 %v1932
      %v2142 = vpop.f32.mrf.mxu0
      %v2143 = vadd.f32 %v1955, %v2142
      %v2144 = vpop.f32.mrf.mxu0
      %v2145 = vpop.f32.mrf.mxu0
      %v2146 = vadd.f32 %v1955, %v2145
      %v2147 = vpop.f32.mrf.mxu0
      %2148 = vmatprep.mubr.bf16.mxu0 0
      %2149 = vmatmul.mubr.bf16.gmra.mxu0 %v1933
      %v2150 = vpop.f32.mrf.mxu0
      %v2151 = vadd.f32 %v1955, %v2150
      %v2152 = vpop.f32.mrf.mxu0
      %v2153 = vpop.f32.mrf.mxu0
      %v2154 = vadd.f32 %v1955, %v2153
      %v2155 = vpop.f32.mrf.mxu0
      %2156 = vmatprep.mubr.bf16.mxu0 0
      %2157 = vmatmul.mubr.bf16.gmra.mxu0 %v1934
      %v2158 = vpop.f32.mrf.mxu0
      %v2159 = vadd.f32 %v1955, %v2158
      %v2160 = vpop.f32.mrf.mxu0
      %v2161 = vpop.f32.mrf.mxu0
      %v2162 = vadd.f32 %v1955, %v2161
      %v2163 = vpop.f32.mrf.mxu0
      %2164 = vdwg.mxu0
      %v2165 = vmax.f32 %v2039, 0.0
      %v2166 = vmax.f32 %v2042, 0.0
      %v2167 = vmax.f32 %v2047, 0.0
      %v2168 = vmax.f32 %v2050, 0.0
      %v2169 = vmax.f32 %v2055, 0.0
      %v2170 = vmax.f32 %v2058, 0.0
      %v2171 = vmax.f32 %v2063, 0.0
      %v2172 = vmax.f32 %v2066, 0.0
      %v2173 = vmax.f32 %v2071, 0.0
      %v2174 = vmax.f32 %v2074, 0.0
      %v2175 = vmax.f32 %v2079, 0.0
      %v2176 = vmax.f32 %v2082, 0.0
      %v2177 = vmax.f32 %v2087, 0.0
      %v2178 = vmax.f32 %v2090, 0.0
      %v2179 = vmax.f32 %v2095, 0.0
      %v2180 = vmax.f32 %v2098, 0.0
      %v2181 = vmax.f32 %v2103, 0.0
      %v2182 = vmax.f32 %v2106, 0.0
      %v2183 = vmax.f32 %v2111, 0.0
      %v2184 = vmax.f32 %v2114, 0.0
      %v2185 = vmax.f32 %v2119, 0.0
      %v2186 = vmax.f32 %v2122, 0.0
      %v2187 = vmax.f32 %v2127, 0.0
      %v2188 = vmax.f32 %v2130, 0.0
      %v2189 = vmax.f32 %v2135, 0.0
      %v2190 = vmax.f32 %v2138, 0.0
      %v2191 = vmax.f32 %v2143, 0.0
      %v2192 = vmax.f32 %v2146, 0.0
      %v2193 = vmax.f32 %v2151, 0.0
      %v2194 = vmax.f32 %v2154, 0.0
      %v2195 = vmax.f32 %v2159, 0.0
      %v2196 = vmax.f32 %v2162, 0.0
      %v2197 = vpack.c.bf16 %v2166, %v2165
      %v2198 = vpack.c.bf16 %v2168, %v2167
      %v2199 = vpack.c.bf16 %v2170, %v2169
      %v2200 = vpack.c.bf16 %v2172, %v2171
      %v2201 = vpack.c.bf16 %v2174, %v2173
      %v2202 = vpack.c.bf16 %v2176, %v2175
      %v2203 = vpack.c.bf16 %v2178, %v2177
      %v2204 = vpack.c.bf16 %v2180, %v2179
      %v2205 = vpack.c.bf16 %v2182, %v2181
      %v2206 = vpack.c.bf16 %v2184, %v2183
      %v2207 = vpack.c.bf16 %v2186, %v2185
      %v2208 = vpack.c.bf16 %v2188, %v2187
      %v2209 = vpack.c.bf16 %v2190, %v2189
      %v2210 = vpack.c.bf16 %v2192, %v2191
      %v2211 = vpack.c.bf16 %v2194, %v2193
      %v2212 = vpack.c.bf16 %v2196, %v2195
      %s2213 = scalar_lea.vmem %s0, 384
      %v2214 = vld [vmem:[%s2213] sm:$0xf]
      %v2215 = vld [vmem:[%s2213 + $0x4] sm:$0xf]
      %v2216 = vld [vmem:[%s2213 + $0x8] sm:$0xf]
      %v2217 = vld [vmem:[%s2213 + $0xc] sm:$0xf]
      %v2218 = vld [vmem:[%s2213 + $0x10] sm:$0xf]
      %v2219 = vld [vmem:[%s2213 + $0x14] sm:$0xf]
      %v2220 = vld [vmem:[%s2213 + $0x18] sm:$0xf]
      %v2221 = vld [vmem:[%s2213 + $0x1c] sm:$0xf]
      %v2222 = vld [vmem:[%s2213 + $0x20] sm:$0xf]
      %v2223 = vld [vmem:[%s2213 + $0x24] sm:$0xf]
      %v2224 = vld [vmem:[%s2213 + $0x28] sm:$0xf]
      %v2225 = vld [vmem:[%s2213 + $0x2c] sm:$0xf]
      %v2226 = vld [vmem:[%s2213 + $0x30] sm:$0xf]
      %v2227 = vld [vmem:[%s2213 + $0x34] sm:$0xf]
      %v2228 = vld [vmem:[%s2213 + $0x38] sm:$0xf]
      %v2229 = vld [vmem:[%s2213 + $0x3c] sm:$0xf]
      %v2230 = vlaneseq
      %v2231 = vshrl.u32 %v2230, 7
      %v2232 = vsub.s32 6, %v2231
      %v2233 = vrot.slane %v216, %v2232
      %v2250 = vunpack.c.l.b16 %v2214
      %v2251 = vunpack.c.l.b16 %v2215
      %v2252 = vunpack.c.l.b16 %v2216
      %v2253 = vunpack.c.l.b16 %v2217
      %v2254 = vunpack.c.l.b16 %v2218
      %v2255 = vunpack.c.l.b16 %v2219
      %v2256 = vunpack.c.l.b16 %v2220
      %v2257 = vunpack.c.l.b16 %v2221
      %v2258 = vunpack.c.l.b16 %v2222
      %v2259 = vunpack.c.l.b16 %v2223
      %v2260 = vunpack.c.l.b16 %v2224
      %v2261 = vunpack.c.l.b16 %v2225
      %v2262 = vunpack.c.l.b16 %v2226
      %v2263 = vunpack.c.l.b16 %v2227
      %v2264 = vunpack.c.l.b16 %v2228
      %v2265 = vunpack.c.l.b16 %v2229
      %v2266 = vpack.c.b16 %v2251, %v2250
      %v2267 = vpack.c.b16 %v2253, %v2252
      %v2268 = vpack.c.b16 %v2255, %v2254
      %v2269 = vpack.c.b16 %v2257, %v2256
      %v2270 = vpack.c.b16 %v2259, %v2258
      %v2271 = vpack.c.b16 %v2261, %v2260
      %v2272 = vpack.c.b16 %v2263, %v2262
      %v2273 = vpack.c.b16 %v2265, %v2264
      %2282 = vmatprep.subr.bf16.mxu0 0
      %2283 = vmatpush1.bf16.msra.mxu0 %v2273
      %2284 = vmatprep.subr.bf16.mxu0 0
      %2285 = vmatpush1.bf16.msra.mxu0 %v2272
      %2286 = vmatprep.subr.bf16.mxu0 0
      %2287 = vmatpush1.bf16.msra.mxu0 %v2271
      %2288 = vmatprep.subr.bf16.mxu0 0
      %2289 = vmatpush1.bf16.msra.mxu0 %v2270
      %2290 = vmatprep.subr.bf16.mxu0 0
      %2291 = vmatpush1.bf16.msra.mxu0 %v2269
      %2292 = vmatprep.subr.bf16.mxu0 0
      %2293 = vmatpush1.bf16.msra.mxu0 %v2268
      %2294 = vmatprep.subr.bf16.mxu0 0
      %2295 = vmatpush1.bf16.msra.mxu0 %v2267
      %2296 = vmatprep.subr.bf16.mxu0 0
      %2297 = vmatpush1.bf16.msra.mxu0 %v2266
      %2298 = vmatprep.subr.bf16.mxu0 0
      %2299 = vmatpush2.bf16.msra.mxu0 0
      %2300 = vmatprep.subr.bf16.mxu0 0
      %2301 = vmatpush2.bf16.msra.mxu0 0
      %2302 = vmatprep.subr.bf16.mxu0 0
      %2303 = vmatpush2.bf16.msra.mxu0 0
      %2304 = vmatprep.subr.bf16.mxu0 0
      %2305 = vmatpush2.bf16.msra.mxu0 0
      %2306 = vmatprep.subr.bf16.mxu0 0
      %2307 = vmatpush2.bf16.msra.mxu0 0
      %2308 = vmatprep.subr.bf16.mxu0 0
      %2309 = vmatpush2.bf16.msra.mxu0 0
      %2310 = vmatprep.subr.bf16.mxu0 0
      %2311 = vmatpush2.bf16.msra.mxu0 0
      %2312 = vmatprep.subr.bf16.mxu0 0
      %2313 = vmatpush2.bf16.msra.mxu0 0
      %2314 = vmatprep.mubr.bf16.mxu0 0
      %2315 = vmatmul.mubr.bf16.gmra.mxu0 %v2197
      %v2316 = vpop.f32.mrf.mxu0
      %v2317 = vadd.f32 %v2233, %v2316
      %v2318 = vpop.f32.mrf.mxu0
      %v2319 = vpop.f32.mrf.mxu0
      %v2320 = vadd.f32 %v2233, %v2319
      %v2321 = vpop.f32.mrf.mxu0
      %2322 = vmatprep.mubr.bf16.mxu0 0
      %2323 = vmatmul.mubr.bf16.gmra.mxu0 %v2198
      %v2324 = vpop.f32.mrf.mxu0
      %v2325 = vadd.f32 %v2233, %v2324
      %v2326 = vpop.f32.mrf.mxu0
      %v2327 = vpop.f32.mrf.mxu0
      %v2328 = vadd.f32 %v2233, %v2327
      %v2329 = vpop.f32.mrf.mxu0
      %2330 = vmatprep.mubr.bf16.mxu0 0
      %2331 = vmatmul.mubr.bf16.gmra.mxu0 %v2199
      %v2332 = vpop.f32.mrf.mxu0
      %v2333 = vadd.f32 %v2233, %v2332
      %v2334 = vpop.f32.mrf.mxu0
      %v2335 = vpop.f32.mrf.mxu0
      %v2336 = vadd.f32 %v2233, %v2335
      %v2337 = vpop.f32.mrf.mxu0
      %2338 = vmatprep.mubr.bf16.mxu0 0
      %2339 = vmatmul.mubr.bf16.gmra.mxu0 %v2200
      %v2340 = vpop.f32.mrf.mxu0
      %v2341 = vadd.f32 %v2233, %v2340
      %v2342 = vpop.f32.mrf.mxu0
      %v2343 = vpop.f32.mrf.mxu0
      %v2344 = vadd.f32 %v2233, %v2343
      %v2345 = vpop.f32.mrf.mxu0
      %2346 = vmatprep.mubr.bf16.mxu0 0
      %2347 = vmatmul.mubr.bf16.gmra.mxu0 %v2201
      %v2348 = vpop.f32.mrf.mxu0
      %v2349 = vadd.f32 %v2233, %v2348
      %v2350 = vpop.f32.mrf.mxu0
      %v2351 = vpop.f32.mrf.mxu0
      %v2352 = vadd.f32 %v2233, %v2351
      %v2353 = vpop.f32.mrf.mxu0
      %2354 = vmatprep.mubr.bf16.mxu0 0
      %2355 = vmatmul.mubr.bf16.gmra.mxu0 %v2202
      %v2356 = vpop.f32.mrf.mxu0
      %v2357 = vadd.f32 %v2233, %v2356
      %v2358 = vpop.f32.mrf.mxu0
      %v2359 = vpop.f32.mrf.mxu0
      %v2360 = vadd.f32 %v2233, %v2359
      %v2361 = vpop.f32.mrf.mxu0
      %2362 = vmatprep.mubr.bf16.mxu0 0
      %2363 = vmatmul.mubr.bf16.gmra.mxu0 %v2203
      %v2364 = vpop.f32.mrf.mxu0
      %v2365 = vadd.f32 %v2233, %v2364
      %v2366 = vpop.f32.mrf.mxu0
      %v2367 = vpop.f32.mrf.mxu0
      %v2368 = vadd.f32 %v2233, %v2367
      %v2369 = vpop.f32.mrf.mxu0
      %2370 = vmatprep.mubr.bf16.mxu0 0
      %2371 = vmatmul.mubr.bf16.gmra.mxu0 %v2204
      %v2372 = vpop.f32.mrf.mxu0
      %v2373 = vadd.f32 %v2233, %v2372
      %v2374 = vpop.f32.mrf.mxu0
      %v2375 = vpop.f32.mrf.mxu0
      %v2376 = vadd.f32 %v2233, %v2375
      %v2377 = vpop.f32.mrf.mxu0
      %2378 = vmatprep.mubr.bf16.mxu0 0
      %2379 = vmatmul.mubr.bf16.gmra.mxu0 %v2205
      %v2380 = vpop.f32.mrf.mxu0
      %v2381 = vadd.f32 %v2233, %v2380
      %v2382 = vpop.f32.mrf.mxu0
      %v2383 = vpop.f32.mrf.mxu0
      %v2384 = vadd.f32 %v2233, %v2383
      %v2385 = vpop.f32.mrf.mxu0
      %2386 = vmatprep.mubr.bf16.mxu0 0
      %2387 = vmatmul.mubr.bf16.gmra.mxu0 %v2206
      %v2388 = vpop.f32.mrf.mxu0
      %v2389 = vadd.f32 %v2233, %v2388
      %v2390 = vpop.f32.mrf.mxu0
      %v2391 = vpop.f32.mrf.mxu0
      %v2392 = vadd.f32 %v2233, %v2391
      %v2393 = vpop.f32.mrf.mxu0
      %2394 = vmatprep.mubr.bf16.mxu0 0
      %2395 = vmatmul.mubr.bf16.gmra.mxu0 %v2207
      %v2396 = vpop.f32.mrf.mxu0
      %v2397 = vadd.f32 %v2233, %v2396
      %v2398 = vpop.f32.mrf.mxu0
      %v2399 = vpop.f32.mrf.mxu0
      %v2400 = vadd.f32 %v2233, %v2399
      %v2401 = vpop.f32.mrf.mxu0
      %2402 = vmatprep.mubr.bf16.mxu0 0
      %2403 = vmatmul.mubr.bf16.gmra.mxu0 %v2208
      %v2404 = vpop.f32.mrf.mxu0
      %v2405 = vadd.f32 %v2233, %v2404
      %v2406 = vpop.f32.mrf.mxu0
      %v2407 = vpop.f32.mrf.mxu0
      %v2408 = vadd.f32 %v2233, %v2407
      %v2409 = vpop.f32.mrf.mxu0
      %2410 = vmatprep.mubr.bf16.mxu0 0
      %2411 = vmatmul.mubr.bf16.gmra.mxu0 %v2209
      %v2412 = vpop.f32.mrf.mxu0
      %v2413 = vadd.f32 %v2233, %v2412
      %v2414 = vpop.f32.mrf.mxu0
      %v2415 = vpop.f32.mrf.mxu0
      %v2416 = vadd.f32 %v2233, %v2415
      %v2417 = vpop.f32.mrf.mxu0
      %2418 = vmatprep.mubr.bf16.mxu0 0
      %2419 = vmatmul.mubr.bf16.gmra.mxu0 %v2210
      %v2420 = vpop.f32.mrf.mxu0
      %v2421 = vadd.f32 %v2233, %v2420
      %v2422 = vpop.f32.mrf.mxu0
      %v2423 = vpop.f32.mrf.mxu0
      %v2424 = vadd.f32 %v2233, %v2423
      %v2425 = vpop.f32.mrf.mxu0
      %2426 = vmatprep.mubr.bf16.mxu0 0
      %2427 = vmatmul.mubr.bf16.gmra.mxu0 %v2211
      %v2428 = vpop.f32.mrf.mxu0
      %v2429 = vadd.f32 %v2233, %v2428
      %v2430 = vpop.f32.mrf.mxu0
      %v2431 = vpop.f32.mrf.mxu0
      %v2432 = vadd.f32 %v2233, %v2431
      %v2433 = vpop.f32.mrf.mxu0
      %2434 = vmatprep.mubr.bf16.mxu0 0
      %2435 = vmatmul.mubr.bf16.gmra.mxu0 %v2212
      %v2436 = vpop.f32.mrf.mxu0
      %v2437 = vadd.f32 %v2233, %v2436
      %v2438 = vpop.f32.mrf.mxu0
      %v2439 = vpop.f32.mrf.mxu0
      %v2440 = vadd.f32 %v2233, %v2439
      %v2441 = vpop.f32.mrf.mxu0
      %2442 = vdwg.mxu0
      %v2443 = vmax.f32 %v2317, 0.0
      %v2444 = vmax.f32 %v2320, 0.0
      %v2445 = vmax.f32 %v2325, 0.0
      %v2446 = vmax.f32 %v2328, 0.0
      %v2447 = vmax.f32 %v2333, 0.0
      %v2448 = vmax.f32 %v2336, 0.0
      %v2449 = vmax.f32 %v2341, 0.0
      %v2450 = vmax.f32 %v2344, 0.0
      %v2451 = vmax.f32 %v2349, 0.0
      %v2452 = vmax.f32 %v2352, 0.0
      %v2453 = vmax.f32 %v2357, 0.0
      %v2454 = vmax.f32 %v2360, 0.0
      %v2455 = vmax.f32 %v2365, 0.0
      %v2456 = vmax.f32 %v2368, 0.0
      %v2457 = vmax.f32 %v2373, 0.0
      %v2458 = vmax.f32 %v2376, 0.0
      %v2459 = vmax.f32 %v2381, 0.0
      %v2460 = vmax.f32 %v2384, 0.0
      %v2461 = vmax.f32 %v2389, 0.0
      %v2462 = vmax.f32 %v2392, 0.0
      %v2463 = vmax.f32 %v2397, 0.0
      %v2464 = vmax.f32 %v2400, 0.0
      %v2465 = vmax.f32 %v2405, 0.0
      %v2466 = vmax.f32 %v2408, 0.0
      %v2467 = vmax.f32 %v2413, 0.0
      %v2468 = vmax.f32 %v2416, 0.0
      %v2469 = vmax.f32 %v2421, 0.0
      %v2470 = vmax.f32 %v2424, 0.0
      %v2471 = vmax.f32 %v2429, 0.0
      %v2472 = vmax.f32 %v2432, 0.0
      %v2473 = vmax.f32 %v2437, 0.0
      %v2474 = vmax.f32 %v2440, 0.0
      %v2475 = vpack.c.bf16 %v2444, %v2443
      %v2476 = vpack.c.bf16 %v2446, %v2445
      %v2477 = vpack.c.bf16 %v2448, %v2447
      %v2478 = vpack.c.bf16 %v2450, %v2449
      %v2479 = vpack.c.bf16 %v2452, %v2451
      %v2480 = vpack.c.bf16 %v2454, %v2453
      %v2481 = vpack.c.bf16 %v2456, %v2455
      %v2482 = vpack.c.bf16 %v2458, %v2457
      %v2483 = vpack.c.bf16 %v2460, %v2459
      %v2484 = vpack.c.bf16 %v2462, %v2461
      %v2485 = vpack.c.bf16 %v2464, %v2463
      %v2486 = vpack.c.bf16 %v2466, %v2465
      %v2487 = vpack.c.bf16 %v2468, %v2467
      %v2488 = vpack.c.bf16 %v2470, %v2469
      %v2489 = vpack.c.bf16 %v2472, %v2471
      %v2490 = vpack.c.bf16 %v2474, %v2473
      %s2491 = scalar_lea.vmem %s0, 448
      %v2492 = vld [vmem:[%s2491] sm:$0xf]
      %v2493 = vld [vmem:[%s2491 + $0x4] sm:$0xf]
      %v2494 = vld [vmem:[%s2491 + $0x8] sm:$0xf]
      %v2495 = vld [vmem:[%s2491 + $0xc] sm:$0xf]
      %v2496 = vld [vmem:[%s2491 + $0x10] sm:$0xf]
      %v2497 = vld [vmem:[%s2491 + $0x14] sm:$0xf]
      %v2498 = vld [vmem:[%s2491 + $0x18] sm:$0xf]
      %v2499 = vld [vmem:[%s2491 + $0x1c] sm:$0xf]
      %v2500 = vld [vmem:[%s2491 + $0x20] sm:$0xf]
      %v2501 = vld [vmem:[%s2491 + $0x24] sm:$0xf]
      %v2502 = vld [vmem:[%s2491 + $0x28] sm:$0xf]
      %v2503 = vld [vmem:[%s2491 + $0x2c] sm:$0xf]
      %v2504 = vld [vmem:[%s2491 + $0x30] sm:$0xf]
      %v2505 = vld [vmem:[%s2491 + $0x34] sm:$0xf]
      %v2506 = vld [vmem:[%s2491 + $0x38] sm:$0xf]
      %v2507 = vld [vmem:[%s2491 + $0x3c] sm:$0xf]
      %v2508 = vlaneseq
      %v2509 = vshrl.u32 %v2508, 7
      %v2510 = vsub.s32 7, %v2509
      %v2511 = vrot.slane %v216, %v2510
      %v2528 = vunpack.c.l.b16 %v2492
      %v2529 = vunpack.c.l.b16 %v2493
      %v2530 = vunpack.c.l.b16 %v2494
      %v2531 = vunpack.c.l.b16 %v2495
      %v2532 = vunpack.c.l.b16 %v2496
      %v2533 = vunpack.c.l.b16 %v2497
      %v2534 = vunpack.c.l.b16 %v2498
      %v2535 = vunpack.c.l.b16 %v2499
      %v2536 = vunpack.c.l.b16 %v2500
      %v2537 = vunpack.c.l.b16 %v2501
      %v2538 = vunpack.c.l.b16 %v2502
      %v2539 = vunpack.c.l.b16 %v2503
      %v2540 = vunpack.c.l.b16 %v2504
      %v2541 = vunpack.c.l.b16 %v2505
      %v2542 = vunpack.c.l.b16 %v2506
      %v2543 = vunpack.c.l.b16 %v2507
      %v2544 = vpack.c.b16 %v2529, %v2528
      %v2545 = vpack.c.b16 %v2531, %v2530
      %v2546 = vpack.c.b16 %v2533, %v2532
      %v2547 = vpack.c.b16 %v2535, %v2534
      %v2548 = vpack.c.b16 %v2537, %v2536
      %v2549 = vpack.c.b16 %v2539, %v2538
      %v2550 = vpack.c.b16 %v2541, %v2540
      %v2551 = vpack.c.b16 %v2543, %v2542
      %2560 = vmatprep.subr.bf16.mxu0 0
      %2561 = vmatpush1.bf16.msra.mxu0 %v2551
      %2562 = vmatprep.subr.bf16.mxu0 0
      %2563 = vmatpush1.bf16.msra.mxu0 %v2550
      %2564 = vmatprep.subr.bf16.mxu0 0
      %2565 = vmatpush1.bf16.msra.mxu0 %v2549
      %2566 = vmatprep.subr.bf16.mxu0 0
      %2567 = vmatpush1.bf16.msra.mxu0 %v2548
      %2568 = vmatprep.subr.bf16.mxu0 0
      %2569 = vmatpush1.bf16.msra.mxu0 %v2547
      %2570 = vmatprep.subr.bf16.mxu0 0
      %2571 = vmatpush1.bf16.msra.mxu0 %v2546
      %2572 = vmatprep.subr.bf16.mxu0 0
      %2573 = vmatpush1.bf16.msra.mxu0 %v2545
      %2574 = vmatprep.subr.bf16.mxu0 0
      %2575 = vmatpush1.bf16.msra.mxu0 %v2544
      %2576 = vmatprep.subr.bf16.mxu0 0
      %2577 = vmatpush2.bf16.msra.mxu0 0
      %2578 = vmatprep.subr.bf16.mxu0 0
      %2579 = vmatpush2.bf16.msra.mxu0 0
      %2580 = vmatprep.subr.bf16.mxu0 0
      %2581 = vmatpush2.bf16.msra.mxu0 0
      %2582 = vmatprep.subr.bf16.mxu0 0
      %2583 = vmatpush2.bf16.msra.mxu0 0
      %2584 = vmatprep.subr.bf16.mxu0 0
      %2585 = vmatpush2.bf16.msra.mxu0 0
      %2586 = vmatprep.subr.bf16.mxu0 0
      %2587 = vmatpush2.bf16.msra.mxu0 0
      %2588 = vmatprep.subr.bf16.mxu0 0
      %2589 = vmatpush2.bf16.msra.mxu0 0
      %2590 = vmatprep.subr.bf16.mxu0 0
      %2591 = vmatpush2.bf16.msra.mxu0 0
      %2592 = vmatprep.mubr.bf16.mxu0 0
      %2593 = vmatmul.mubr.bf16.gmra.mxu0 %v2475
      %v2594 = vpop.f32.mrf.mxu0
      %v2595 = vadd.f32 %v2511, %v2594
      %v2596 = vpop.f32.mrf.mxu0
      %v2597 = vpop.f32.mrf.mxu0
      %v2598 = vadd.f32 %v2511, %v2597
      %v2599 = vpop.f32.mrf.mxu0
      %2600 = vmatprep.mubr.bf16.mxu0 0
      %2601 = vmatmul.mubr.bf16.gmra.mxu0 %v2476
      %v2602 = vpop.f32.mrf.mxu0
      %v2603 = vadd.f32 %v2511, %v2602
      %v2604 = vpop.f32.mrf.mxu0
      %v2605 = vpop.f32.mrf.mxu0
      %v2606 = vadd.f32 %v2511, %v2605
      %v2607 = vpop.f32.mrf.mxu0
      %2608 = vmatprep.mubr.bf16.mxu0 0
      %2609 = vmatmul.mubr.bf16.gmra.mxu0 %v2477
      %v2610 = vpop.f32.mrf.mxu0
      %v2611 = vadd.f32 %v2511, %v2610
      %v2612 = vpop.f32.mrf.mxu0
      %v2613 = vpop.f32.mrf.mxu0
      %v2614 = vadd.f32 %v2511, %v2613
      %v2615 = vpop.f32.mrf.mxu0
      %2616 = vmatprep.mubr.bf16.mxu0 0
      %2617 = vmatmul.mubr.bf16.gmra.mxu0 %v2478
      %v2618 = vpop.f32.mrf.mxu0
      %v2619 = vadd.f32 %v2511, %v2618
      %v2620 = vpop.f32.mrf.mxu0
      %v2621 = vpop.f32.mrf.mxu0
      %v2622 = vadd.f32 %v2511, %v2621
      %v2623 = vpop.f32.mrf.mxu0
      %2624 = vmatprep.mubr.bf16.mxu0 0
      %2625 = vmatmul.mubr.bf16.gmra.mxu0 %v2479
      %v2626 = vpop.f32.mrf.mxu0
      %v2627 = vadd.f32 %v2511, %v2626
      %v2628 = vpop.f32.mrf.mxu0
      %v2629 = vpop.f32.mrf.mxu0
      %v2630 = vadd.f32 %v2511, %v2629
      %v2631 = vpop.f32.mrf.mxu0
      %2632 = vmatprep.mubr.bf16.mxu0 0
      %2633 = vmatmul.mubr.bf16.gmra.mxu0 %v2480
      %v2634 = vpop.f32.mrf.mxu0
      %v2635 = vadd.f32 %v2511, %v2634
      %v2636 = vpop.f32.mrf.mxu0
      %v2637 = vpop.f32.mrf.mxu0
      %v2638 = vadd.f32 %v2511, %v2637
      %v2639 = vpop.f32.mrf.mxu0
      %2640 = vmatprep.mubr.bf16.mxu0 0
      %2641 = vmatmul.mubr.bf16.gmra.mxu0 %v2481
      %v2642 = vpop.f32.mrf.mxu0
      %v2643 = vadd.f32 %v2511, %v2642
      %v2644 = vpop.f32.mrf.mxu0
      %v2645 = vpop.f32.mrf.mxu0
      %v2646 = vadd.f32 %v2511, %v2645
      %v2647 = vpop.f32.mrf.mxu0
      %2648 = vmatprep.mubr.bf16.mxu0 0
      %2649 = vmatmul.mubr.bf16.gmra.mxu0 %v2482
      %v2650 = vpop.f32.mrf.mxu0
      %v2651 = vadd.f32 %v2511, %v2650
      %v2652 = vpop.f32.mrf.mxu0
      %v2653 = vpop.f32.mrf.mxu0
      %v2654 = vadd.f32 %v2511, %v2653
      %v2655 = vpop.f32.mrf.mxu0
      %2656 = vmatprep.mubr.bf16.mxu0 0
      %2657 = vmatmul.mubr.bf16.gmra.mxu0 %v2483
      %v2658 = vpop.f32.mrf.mxu0
      %v2659 = vadd.f32 %v2511, %v2658
      %v2660 = vpop.f32.mrf.mxu0
      %v2661 = vpop.f32.mrf.mxu0
      %v2662 = vadd.f32 %v2511, %v2661
      %v2663 = vpop.f32.mrf.mxu0
      %2664 = vmatprep.mubr.bf16.mxu0 0
      %2665 = vmatmul.mubr.bf16.gmra.mxu0 %v2484
      %v2666 = vpop.f32.mrf.mxu0
      %v2667 = vadd.f32 %v2511, %v2666
      %v2668 = vpop.f32.mrf.mxu0
      %v2669 = vpop.f32.mrf.mxu0
      %v2670 = vadd.f32 %v2511, %v2669
      %v2671 = vpop.f32.mrf.mxu0
      %2672 = vmatprep.mubr.bf16.mxu0 0
      %2673 = vmatmul.mubr.bf16.gmra.mxu0 %v2485
      %v2674 = vpop.f32.mrf.mxu0
      %v2675 = vadd.f32 %v2511, %v2674
      %v2676 = vpop.f32.mrf.mxu0
      %v2677 = vpop.f32.mrf.mxu0
      %v2678 = vadd.f32 %v2511, %v2677
      %v2679 = vpop.f32.mrf.mxu0
      %2680 = vmatprep.mubr.bf16.mxu0 0
      %2681 = vmatmul.mubr.bf16.gmra.mxu0 %v2486
      %v2682 = vpop.f32.mrf.mxu0
      %v2683 = vadd.f32 %v2511, %v2682
      %v2684 = vpop.f32.mrf.mxu0
      %v2685 = vpop.f32.mrf.mxu0
      %v2686 = vadd.f32 %v2511, %v2685
      %v2687 = vpop.f32.mrf.mxu0
      %2688 = vmatprep.mubr.bf16.mxu0 0
      %2689 = vmatmul.mubr.bf16.gmra.mxu0 %v2487
      %v2690 = vpop.f32.mrf.mxu0
      %v2691 = vadd.f32 %v2511, %v2690
      %v2692 = vpop.f32.mrf.mxu0
      %v2693 = vpop.f32.mrf.mxu0
      %v2694 = vadd.f32 %v2511, %v2693
      %v2695 = vpop.f32.mrf.mxu0
      %2696 = vmatprep.mubr.bf16.mxu0 0
      %2697 = vmatmul.mubr.bf16.gmra.mxu0 %v2488
      %v2698 = vpop.f32.mrf.mxu0
      %v2699 = vadd.f32 %v2511, %v2698
      %v2700 = vpop.f32.mrf.mxu0
      %v2701 = vpop.f32.mrf.mxu0
      %v2702 = vadd.f32 %v2511, %v2701
      %v2703 = vpop.f32.mrf.mxu0
      %2704 = vmatprep.mubr.bf16.mxu0 0
      %2705 = vmatmul.mubr.bf16.gmra.mxu0 %v2489
      %v2706 = vpop.f32.mrf.mxu0
      %v2707 = vadd.f32 %v2511, %v2706
      %v2708 = vpop.f32.mrf.mxu0
      %v2709 = vpop.f32.mrf.mxu0
      %v2710 = vadd.f32 %v2511, %v2709
      %v2711 = vpop.f32.mrf.mxu0
      %2712 = vmatprep.mubr.bf16.mxu0 0
      %2713 = vmatmul.mubr.bf16.gmra.mxu0 %v2490
      %v2714 = vpop.f32.mrf.mxu0
      %v2715 = vadd.f32 %v2511, %v2714
      %v2716 = vpop.f32.mrf.mxu0
      %v2717 = vpop.f32.mrf.mxu0
      %v2718 = vadd.f32 %v2511, %v2717
      %v2719 = vpop.f32.mrf.mxu0
      %2720 = vdwg.mxu0
      %2721 = vst.msk [vmem:[%s213] sm:$0xff] %vm277, %v2595
      %2722 = vst.msk [vmem:[%s213 + $0x8] sm:$0xff] %vm277, %v2598
      %2723 = vst.msk [vmem:[%s213 + $0x10] sm:$0xff] %vm277, %v2603
      %2724 = vst.msk [vmem:[%s213 + $0x18] sm:$0xff] %vm277, %v2606
      %2725 = vst.msk [vmem:[%s213 + $0x20] sm:$0xff] %vm277, %v2611
      %2726 = vst.msk [vmem:[%s213 + $0x28] sm:$0xff] %vm277, %v2614
      %2727 = vst.msk [vmem:[%s213 + $0x30] sm:$0xff] %vm277, %v2619
      %2728 = vst.msk [vmem:[%s213 + $0x38] sm:$0xff] %vm277, %v2622
      %2729 = vst.msk [vmem:[%s213 + $0x40] sm:$0xff] %vm277, %v2627
      %2730 = vst.msk [vmem:[%s213 + $0x48] sm:$0xff] %vm277, %v2630
      %2731 = vst.msk [vmem:[%s213 + $0x50] sm:$0xff] %vm277, %v2635
      %2732 = vst.msk [vmem:[%s213 + $0x58] sm:$0xff] %vm277, %v2638
      %2733 = vst.msk [vmem:[%s213 + $0x60] sm:$0xff] %vm277, %v2643
      %2734 = vst.msk [vmem:[%s213 + $0x68] sm:$0xff] %vm277, %v2646
      %2735 = vst.msk [vmem:[%s213 + $0x70] sm:$0xff] %vm277, %v2651
      %2736 = vst.msk [vmem:[%s213 + $0x78] sm:$0xff] %vm277, %v2654
      %2737 = vst.msk [vmem:[%s213 + $0x80] sm:$0xff] %vm277, %v2659
      %2738 = vst.msk [vmem:[%s213 + $0x88] sm:$0xff] %vm277, %v2662
      %2739 = vst.msk [vmem:[%s213 + $0x90] sm:$0xff] %vm277, %v2667
      %2740 = vst.msk [vmem:[%s213 + $0x98] sm:$0xff] %vm277, %v2670
      %2741 = vst.msk [vmem:[%s213 + $0xa0] sm:$0xff] %vm277, %v2675
      %2742 = vst.msk [vmem:[%s213 + $0xa8] sm:$0xff] %vm277, %v2678
      %2743 = vst.msk [vmem:[%s213 + $0xb0] sm:$0xff] %vm277, %v2683
      %2744 = vst.msk [vmem:[%s213 + $0xb8] sm:$0xff] %vm277, %v2686
      %2745 = vst.msk [vmem:[%s213 + $0xc0] sm:$0xff] %vm277, %v2691
      %2746 = vst.msk [vmem:[%s213 + $0xc8] sm:$0xff] %vm277, %v2694
      %2747 = vst.msk [vmem:[%s213 + $0xd0] sm:$0xff] %vm277, %v2699
      %2748 = vst.msk [vmem:[%s213 + $0xd8] sm:$0xff] %vm277, %v2702
      %2749 = vst.msk [vmem:[%s213 + $0xe0] sm:$0xff] %vm277, %v2707
      %2750 = vst.msk [vmem:[%s213 + $0xe8] sm:$0xff] %vm277, %v2710
      %2751 = vst.msk [vmem:[%s213 + $0xf0] sm:$0xff] %vm277, %v2715
      %2752 = vst.msk [vmem:[%s213 + $0xf8] sm:$0xff] %vm277, %v2718
      %s2753 = smul.u32 32, %s16
      %p2754 = scmp.lt.s32.totalorder %s2753, 63
      %s2755 = scalar_select %p2754, %s2753, 63
      %s2756 = smul.addr %s2755, 8
      %s2757 = scalar_lea.vmem %s3, %s2756
      %s2758 = smul.u32 32, %s16
      %p2759 = scmp.lt.s32.totalorder %s2758, 63
      %s2760 = scalar_select %p2759, %s2758, 63
      %s2761 = smul.addr %s2760, 8
      %s2762 = scalar_lea.vmem %s4, %s2761
      // Predicated region
      $region33: #{_forward_impl.1} parent=31 // pred_check
        %p2763 = pneg %p102
      $region34: #{_forward_impl.1} parent=31 // pred_check_branch
        %2765 = sbr.rel (%p2763) target = $region36
      $region35: #{_forward_impl.1} parent=31 // pred_region
        %s2766 = smul.u32 32, %s16
      $region36: #{_forward_impl.1} parent=31 // pred_fallthru
        _
      // Predicated region
      $region37: #{_forward_impl.1} parent=31 // pred_check
        %p2767 = pneg %p128
      $region38: #{_forward_impl.1} parent=31 // pred_check_branch
        %2769 = sbr.rel (%p2767) target = $region40
      $region39: #{_forward_impl.1} parent=31 // pred_region
        %s2770 = smul.u32 32, %s16
      $region40: #{_forward_impl.1} parent=31 // pred_fallthru
        _
    $region32: #{_forward_impl.1} parent=5 // pred_fallthru
      _
    %p2771 = scmp.le.s32.totalorder 2, %s11
    // Predicated region
    $region41: #{_forward_impl.1} parent=5 // pred_check
      %p2772 = pneg %p2771
    $region42: #{_forward_impl.1} parent=5 // pred_check_branch
      %2774 = sbr.rel (%p2772) target = $region44
    $region43: #{_forward_impl.1} parent=5 // pred_region
      %s2775 = ssub.s32 %s11, 2
      // Predicated region
      $region45: #{_forward_impl.1} parent=43 // pred_check
        %p2776 = pneg %p108
      $region46: #{_forward_impl.1} parent=43 // pred_check_branch
        %2778 = sbr.rel (%p2776) target = $region48
      $region47: #{_forward_impl.1} parent=43 // pred_region
        %s2779 = smul.u32 32, %s17
        %p2780 = scmp.lt.s32.totalorder %s2779, 63
        %s2781 = scalar_select %p2780, %s2779, 63
        %s2782 = smul.addr %s2781, 8
        %s2783 = scalar_lea.vmem %s3, %s2782
      $region48: #{_forward_impl.1} parent=43 // pred_fallthru
        _
      // Predicated region
      $region49: #{_forward_impl.1} parent=43 // pred_check
        %p2784 = pneg %p134
      $region50: #{_forward_impl.1} parent=43 // pred_check_branch
        %2786 = sbr.rel (%p2784) target = $region52
      $region51: #{_forward_impl.1} parent=43 // pred_region
        %s2787 = smul.u32 32, %s17
        %p2788 = scmp.lt.s32.totalorder %s2787, 63
        %s2789 = scalar_select %p2788, %s2787, 63
        %s2790 = smul.addr %s2789, 8
        %s2791 = scalar_lea.vmem %s4, %s2790
      $region52: #{_forward_impl.1} parent=43 // pred_fallthru
        _
    $region44: #{_forward_impl.1} parent=5 // pred_fallthru
      _
  $region6: #{_forward_impl.1} parent=0 // loop_footer
    %s15 = sadd.s32 1, %s11
  $region7: #{_forward_impl.1} parent=0 // loop_footer_branch
    %10 = sbr.rel target = $region3
  $region8: #{_forward_impl.1} parent=0 // loop_exit
    _

</llo_original>
